<compile_context>
chip_gen: v6e
topology: v6e:2x2x1
jax: 0.10.0
libtpu: 0.0.40
codegen_flags: <defaults>
</compile_context>

<pallas_src>
import functools
import math

import numpy as np
import jax
import jax.numpy as jnp
from jax import lax
from jax.experimental import pallas as pl
from jax.experimental.pallas import tpu as pltpu


# ----------------------------------------------------------------------------------
# Parameter / buffer construction (glue; mirrors _SRI_ConvNd.__init__ + reset_parameters)
# ----------------------------------------------------------------------------------
def make_weight_index_mat(kernel_size: int, ri_k: int, force_circular: bool = False) -> np.ndarray:
    """Builds the (ri_k, KH*KW) ring-mask matrix for kernel_shape == 'o'.

    scipy.ndimage.distance_transform_edt of a map with a single zero at the center is
    just the Euclidean distance to the center, so compute it in closed form.
    """
    H = W = kernel_size
    yy, xx = np.meshgrid(np.arange(H), np.arange(W), indexing="ij")
    D = np.sqrt((yy - H // 2) ** 2 + (xx - W // 2) ** 2)
    max_dist = H // 2 + 0.5 if force_circular else D.max()
    num_levels = ri_k + 1 if force_circular else ri_k
    levels = np.linspace(D.min(), max_dist, num=num_levels)
    mats = []
    for i in range(num_levels):
        if i == num_levels - 1:
            if force_circular:
                continue
            idx = (D == levels[i]).astype(np.float32)
        else:
            idx = ((D >= levels[i]) & (D < levels[i + 1])).astype(np.float32)
        mats.append(idx.reshape(-1))
    return np.stack(mats, axis=0).astype(np.float32)  # (ri_k, H*W)


def init_sri_conv2d_params(key, in_channels, out_channels, kernel_size):
    """Deterministic init matching _SRI_ConvNd.reset_parameters (Kaiming-uniform style)."""
    KH = KW = kernel_size
    ri_k = kernel_size // 2 + 1 + 1  # kernel_shape='o', force_circular=False
    kw_key, kb_key = jax.random.split(key, 2)
    fan_conv = in_channels * KH * KW
    bound_w = 1.0 / math.sqrt(fan_conv)
    weight = jax.random.uniform(kw_key, (out_channels, in_channels, ri_k),
                                jnp.float32, -bound_w, bound_w)
    bound_b = 1.0 / math.sqrt(in_channels * ri_k)
    bias = jax.random.uniform(kb_key, (out_channels,), jnp.float32, -bound_b, bound_b)
    index_mat = jnp.asarray(make_weight_index_mat(kernel_size, ri_k))  # (ri_k, KH*KW)
    return weight, bias, index_mat, ri_k


def expand_sri_weight(weight, index_mat, kernel_size):
    """SRI weight (Cout, Cin, ri_k) -> full conv weight (Cout, Cin, KH, KW).

    Matches torch.einsum('ijkw,ijk->ijw', weight_index_mat, weight).reshape(...).
    """
    Cout, Cin, _ = weight.shape
    KH = KW = kernel_size
    w_full = jnp.einsum("kp,ock->ocp", index_mat, weight).reshape(Cout, Cin, KH, KW)
    return w_full


# ----------------------------------------------------------------------------------
# Pallas kernel: one grid step computes TH output rows x one Cout tile of one batch
# element, with all conv taps fused into the MXU K dimension (im2col in VMEM).
# ----------------------------------------------------------------------------------
def _sri_conv2d_kernel(x_ref, w_ref, b_ref, o_ref, *, KH, KW, TH, Wo, fuse_full):
    # x_ref: (Hp, Wp, Cin)       bf16 padded NHWC image of the current batch element
    # w_ref: (KH*KW*Cin, TC)     bf16 im2col weight slab   (fuse_full)
    #        (KH, KW*Cin, TC)    bf16 per-kh weight slabs   (otherwise)
    # b_ref: (1, TC)             f32
    # o_ref: (TH*Wo, TC)         output tile (lane-dense: TC % 128 == 0)
    ht = pl.program_id(2)
    row0 = ht * TH
    if TH % 8 == 0:
        row0 = pl.multiple_of(row0, 8)
    cin = x_ref.shape[-1]
    m = TH * Wo

    # One (TH + KH - 1, Wp, Cin) halo row-slab per grid step; every tap view below is a
    # static slice of this already-resident value (no re-loads per tap).
    slab = x_ref[pl.ds(row0, TH + KH - 1), :, :]

    if fuse_full:
        # Full im2col: a single MXU matmul with K = KH*KW*Cin (tap order (kh, kw, cin)
        # matches the wrapper's weight layout).
        taps = [slab[kh:kh + TH, kw:kw + Wo, :].reshape(m, cin)
                for kh in range(KH) for kw in range(KW)]
        patch = jnp.concatenate(taps, axis=-1)                       # (m, KH*KW*Cin) bf16
        acc = jnp.dot(patch, w_ref[...], preferred_element_type=jnp.float32)
    else:
        # Per-kh fusion: K = KW*Cin per matmul (Cin too large for one lane concat).
        acc = jnp.zeros((m, o_ref.shape[-1]), jnp.float32)
        for kh in range(KH):
            taps = [slab[kh:kh + TH, kw:kw + Wo, :].reshape(m, cin) for kw in range(KW)]
            patch = jnp.concatenate(taps, axis=-1)                   # (m, KW*Cin) bf16
            acc = acc + jnp.dot(patch, w_ref[kh], preferred_element_type=jnp.float32)

    o_ref[...] = (acc + b_ref[...]).astype(o_ref.dtype)


def _pick_row_tile(Ho, Wo, cout_tile, *, min_row_tiles=1, m_target=256, m_cap=512):
    """Pick TH | Ho so M = TH*Wo is MXU-friendly while the f32 accumulator fits vregs.

    Hard requirement: the (TH*Wo, cout_tile) output block is sublane-aligned (M % 8 == 0
    or M covers the full Ho*Wo extent).  Soft preferences: at least `min_row_tiles` row
    tiles (keeps both v7x TensorCores busy for small batches) and M close to ~256.
    """
    lane_blocks = max(1, -(-cout_tile // 128))
    vreg_budget = 32 if lane_blocks == 1 else 24

    def vregs(m):
        return -(-m // 8) * lane_blocks

    divs = [d for d in range(1, Ho + 1) if Ho % d == 0]
    aligned = [d for d in divs if (d * Wo) % 8 == 0 or d == Ho]
    if not aligned:
        aligned = [Ho]
    fitting = [d for d in aligned if vregs(d * Wo) <= vreg_budget and d * Wo <= m_cap]
    if not fitting:
        # Even the smallest aligned tile blows the vreg budget (very large Wo): take the
        # smallest aligned M and accept some accumulator pressure.
        # TODO(synk): add a Wo column-tile grid axis instead of shrinking TH further.
        return min(aligned, key=lambda d: d * Wo)

    def score(d):
        m = d * Wo
        return (Ho // d >= min_row_tiles, -abs(m - m_target), m)

    return max(fitting, key=score)


def sri_conv2d_forward(x_nchw, weight, bias, index_mat, *, kernel_size=3, padding=1,
                       out_dtype=None):
    """Forward pass of SRI_Conv2d (stride=1, dilation=1, groups=1, zeros padding)."""
    N, Cin, H, W = x_nchw.shape
    Cout, Cin_w, ri_k = weight.shape
    assert Cin_w == Cin
    KH = KW = kernel_size
    out_dtype = x_nchw.dtype if out_dtype is None else out_dtype

    # --- expand SRI weight -> full conv weight (== infer_weight_matrix) ----------------
    w_full = expand_sri_weight(weight, index_mat, kernel_size)        # (Cout, Cin, KH, KW) f32

    # --- lane-dense output: pad Cout to a multiple of 128, tile it at <=256 ------------
    Cout_p = -(-Cout // 128) * 128
    TC = 256 if Cout_p % 256 == 0 else 128
    n_co = Cout_p // TC

    # im2col weight, K ordered (kh, kw, cin), lanes = Cout_p, bf16 MXU operand.
    w_k = jnp.transpose(w_full, (2, 3, 1, 0)).reshape(KH * KW * Cin, Cout)
    w_k = jnp.pad(w_k, ((0, 0), (0, Cout_p - Cout))).astype(jnp.bfloat16)
    fuse_full = Cin <= 64
    if not fuse_full:
        w_k = w_k.reshape(KH, KW * Cin, Cout_p)
    b2 = jnp.pad(bias, (0, Cout_p - Cout)).reshape(1, Cout_p).astype(jnp.float32)

    # --- layout change + zero padding + bf16 cast (fuses into a single XLA pass) -------
    xp = jnp.pad(jnp.transpose(x_nchw, (0, 2, 3, 1)),
                 ((0, 0), (padding, padding), (padding, padding), (0, 0))
                 ).astype(jnp.bfloat16)
    Hp, Wp = H + 2 * padding, W + 2 * padding
    Ho, Wo = Hp - KH + 1, Wp - KW + 1

    min_row_tiles = 1 if N * n_co >= 2 else 2        # keep both v7x TCs busy for N == 1
    TH = _pick_row_tile(Ho, Wo, TC, min_row_tiles=min_row_tiles)
    assert Ho % TH == 0
    n_ht = Ho // TH
    M = TH * Wo

    # --- generation-aware VMEM budget (exact byte count, no double counting) -----------
    out_isz = jnp.dtype(out_dtype).itemsize
    vmem_bytes = (2 * Hp * Wp * Cin * 2                              # image bf16 x 2 buffers
                  + (1 if n_co == 1 else 2) * KH * KW * Cin * TC * 2 # weight slab(s)
                  + 8 * 128 * 4                                      # bias tile (padded)
                  + 2 * M * TC * out_isz)                            # output tile x 2 buffers
    try:
        info = pltpu.get_tpu_info()
        vmem_cap = int(getattr(info, "vmem_capacity_bytes", 64 * 2**20))
    except Exception:
        vmem_cap = 64 * 2**20                                        # v7x-safe fallback
    vmem_limit = int(min(int(0.85 * vmem_cap),
                         max(32 * 2**20, int(1.25 * vmem_bytes) + (4 << 20))))

    # Weight / bias: constant block index when n_co == 1 -> a single buffer is enough.
    const_w = {"pipeline_mode": pl.Buffered(1)} if n_co == 1 else {}
    if fuse_full:
        w_spec = pl.BlockSpec((KH * KW * Cin, TC), lambda n, co, ht: (0, co), **const_w)
    else:
        w_spec = pl.BlockSpec((KH, KW * Cin, TC), lambda n, co, ht: (0, 0, co), **const_w)
    b_spec = pl.BlockSpec((1, TC), lambda n, co, ht: (0, co), **const_w)

    kern = functools.partial(_sri_conv2d_kernel, KH=KH, KW=KW, TH=TH, Wo=Wo,
                             fuse_full=fuse_full)
    out2d = pl.pallas_call(
        kern,
        out_shape=jax.ShapeDtypeStruct((N, Ho * Wo, Cout_p), out_dtype),
        grid_spec=pltpu.PrefetchScalarGridSpec(
            num_scalar_prefetch=0,
            grid=(N, n_co, n_ht),
            in_specs=[
                # Padded image of the current batch element; resident across the inner
                # axes, double-buffered across the batch axis.
                pl.BlockSpec((None, Hp, Wp, Cin), lambda n, co, ht: (n, 0, 0, 0)),
                w_spec,
                b_spec,
            ],
            # Flat, lane-dense (TH*Wo, TC) output slab per step (TC % 128 == 0).
            out_specs=pl.BlockSpec((None, TH * Wo, TC), lambda n, co, ht: (n, ht, co)),
        ),
        compiler_params=pltpu.CompilerParams(
            dimension_semantics=("parallel", "parallel", "parallel"),
            vmem_limit_bytes=vmem_limit),
    )(xp, w_k, b2)

    out_nchw = jnp.transpose(out2d.reshape(N, Ho, Wo, Cout_p), (0, 3, 1, 2))[:, :Cout]
    return out_nchw, w_full


if __name__ == "__main__":
    # Small, deterministic example consistent with SRI_Conv2d(4, 8, kernel_size=3, padding=1)
    N, Cin, Cout, H, W, K, P = 2, 4, 8, 16, 16, 3, 1

    key = jax.random.PRNGKey(0)
    kx, kparam = jax.random.split(key)
    x = jax.random.normal(kx, (N, Cin, H, W), jnp.float32)
    weight, bias, index_mat, ri_k = init_sri_conv2d_params(kparam, Cin, Cout, K)

    out, w_full = sri_conv2d_forward(x, weight, bias, index_mat, kernel_size=K, padding=P)
    out = jax.block_until_ready(out)

    # Reference: plain XLA conv with the same expanded weight (F.conv2d semantics), f32.
    ref = lax.conv_general_dilated(
        x, w_full, window_strides=(1, 1), padding=((P, P), (P, P)),
        dimension_numbers=("NCHW", "OIHW", "NCHW"),
        precision=lax.Precision.HIGHEST,
    ) + bias[None, :, None, None]

    assert out.shape == (N, Cout, H, W), out.shape
    # Kernel uses bf16 MXU operands with f32 accumulation -> compare against the f32
    # reference with a correspondingly looser tolerance.
    np.testing.assert_allclose(np.asarray(out), np.asarray(ref), rtol=2e-2, atol=2e-2)

    print("KERNEL_OK")
</pallas_src>

<mosaic_0001>
module attributes {stable_mosaic.version = 11 : i64} {
  func.func @_sri_conv2d_kernel(%arg0: i32, %arg1: i32, %arg2: i32, %arg3: memref<1x18x18x4xbf16, #tpu.memory_space<vmem>>, %arg4: memref<36x128xbf16, #tpu.memory_space<vmem>>, %arg5: memref<1x128xf32, #tpu.memory_space<vmem>>, %arg6: memref<1x256x128xf32, #tpu.memory_space<vmem>>) attributes {dimension_semantics = [#tpu.dimension_semantics<parallel>, #tpu.dimension_semantics<parallel>, #tpu.dimension_semantics<parallel>], iteration_bounds = array<i64: 2, 1, 1>, scalar_prefetch = 0 : i64, scratch_operands = 0 : i64, tpu.core_type = #tpu.core_type<tc>, window_params = [{transform_indices = @transform_0, window_bounds = array<i64: 1, 18, 18, 4>}, {pipeline_mode = #tpu.pipeline_mode<synchronous>, transform_indices = @transform_1, window_bounds = array<i64: 36, 128>}, {pipeline_mode = #tpu.pipeline_mode<synchronous>, transform_indices = @transform_2, window_bounds = array<i64: 1, 128>}, {transform_indices = @transform_3, window_bounds = array<i64: 1, 256, 128>}]} {
    %c16_i32 = arith.constant 16 : i32
    %0 = arith.muli %arg2, %c16_i32 : i32
    %1 = tpu.assume_multiple %0, 8 : i32
    %c0 = arith.constant 0 : index
    %2 = arith.index_cast %1 : i32 to index
    %c0_0 = arith.constant 0 : index
    %c0_1 = arith.constant 0 : index
    %3 = vector.load %arg3[%c0, %2, %c0_0, %c0_1] : memref<1x18x18x4xbf16, #tpu.memory_space<vmem>>, vector<1x18x18x4xbf16>
    %4 = vector.shape_cast %3 : vector<1x18x18x4xbf16> to vector<18x18x4xbf16>
    %5 = vector.extract_strided_slice %4 {offsets = [0, 0, 0], sizes = [16, 16, 4], strides = [1, 1, 1]} : vector<18x18x4xbf16> to vector<16x16x4xbf16>
    %6 = vector.shape_cast %5 : vector<16x16x4xbf16> to vector<256x4xbf16>
    %7 = vector.extract_strided_slice %4 {offsets = [0, 1, 0], sizes = [16, 16, 4], strides = [1, 1, 1]} : vector<18x18x4xbf16> to vector<16x16x4xbf16>
    %8 = vector.shape_cast %7 : vector<16x16x4xbf16> to vector<256x4xbf16>
    %9 = vector.extract_strided_slice %4 {offsets = [0, 2, 0], sizes = [16, 16, 4], strides = [1, 1, 1]} : vector<18x18x4xbf16> to vector<16x16x4xbf16>
    %10 = vector.shape_cast %9 : vector<16x16x4xbf16> to vector<256x4xbf16>
    %11 = vector.extract_strided_slice %4 {offsets = [1, 0, 0], sizes = [16, 16, 4], strides = [1, 1, 1]} : vector<18x18x4xbf16> to vector<16x16x4xbf16>
    %12 = vector.shape_cast %11 : vector<16x16x4xbf16> to vector<256x4xbf16>
    %13 = vector.extract_strided_slice %4 {offsets = [1, 1, 0], sizes = [16, 16, 4], strides = [1, 1, 1]} : vector<18x18x4xbf16> to vector<16x16x4xbf16>
    %14 = vector.shape_cast %13 : vector<16x16x4xbf16> to vector<256x4xbf16>
    %15 = vector.extract_strided_slice %4 {offsets = [1, 2, 0], sizes = [16, 16, 4], strides = [1, 1, 1]} : vector<18x18x4xbf16> to vector<16x16x4xbf16>
    %16 = vector.shape_cast %15 : vector<16x16x4xbf16> to vector<256x4xbf16>
    %17 = vector.extract_strided_slice %4 {offsets = [2, 0, 0], sizes = [16, 16, 4], strides = [1, 1, 1]} : vector<18x18x4xbf16> to vector<16x16x4xbf16>
    %18 = vector.shape_cast %17 : vector<16x16x4xbf16> to vector<256x4xbf16>
    %19 = vector.extract_strided_slice %4 {offsets = [2, 1, 0], sizes = [16, 16, 4], strides = [1, 1, 1]} : vector<18x18x4xbf16> to vector<16x16x4xbf16>
    %20 = vector.shape_cast %19 : vector<16x16x4xbf16> to vector<256x4xbf16>
    %21 = vector.extract_strided_slice %4 {offsets = [2, 2, 0], sizes = [16, 16, 4], strides = [1, 1, 1]} : vector<18x18x4xbf16> to vector<16x16x4xbf16>
    %22 = vector.shape_cast %21 : vector<16x16x4xbf16> to vector<256x4xbf16>
    %23 = tpu.concatenate %6, %8, %10, %12, %14, %16, %18, %20, %22 in 1 : vector<256x4xbf16>, vector<256x4xbf16>, vector<256x4xbf16>, vector<256x4xbf16>, vector<256x4xbf16>, vector<256x4xbf16>, vector<256x4xbf16>, vector<256x4xbf16>, vector<256x4xbf16> -> vector<256x36xbf16>
    %c0_2 = arith.constant 0 : index
    %c0_3 = arith.constant 0 : index
    %24 = vector.load %arg4[%c0_2, %c0_3] : memref<36x128xbf16, #tpu.memory_space<vmem>>, vector<36x128xbf16>
    %cst = arith.constant dense<0.000000e+00> : vector<256x128xf32>
    %25 = tpu.matmul %23, %24, %cst {dimension_numbers = #tpu.dot_dimension_numbers<[1], [0], [0], [1], [0, 0, 1, 1], [], []>} : vector<256x36xbf16>, vector<36x128xbf16>, vector<256x128xf32> -> vector<256x128xf32>
    %c0_4 = arith.constant 0 : index
    %c0_5 = arith.constant 0 : index
    %26 = vector.load %arg5[%c0_4, %c0_5] : memref<1x128xf32, #tpu.memory_space<vmem>>, vector<1x128xf32>
    %27 = vector.broadcast %26 : vector<1x128xf32> to vector<256x128xf32>
    %28 = arith.addf %25, %27 : vector<256x128xf32>
    %c0_6 = arith.constant 0 : index
    %c0_7 = arith.constant 0 : index
    %c0_8 = arith.constant 0 : index
    %29 = vector.load %arg6[%c0_6, %c0_7, %c0_8] : memref<1x256x128xf32, #tpu.memory_space<vmem>>, vector<1x256x128xf32>
    %30 = vector.shape_cast %29 : vector<1x256x128xf32> to vector<256x128xf32>
    %31 = vector.shape_cast %28 : vector<256x128xf32> to vector<1x256x128xf32>
    tpu.vector_store %arg6[%c0_6, %c0_7, %c0_8], %31 {strides = array<i32>} : memref<1x256x128xf32, #tpu.memory_space<vmem>>, vector<1x256x128xf32>,
    return
  }
  func.func @transform_0(%arg0: i32, %arg1: i32, %arg2: i32) -> (i32, i32, i32, i32) {
    %c0_i32 = arith.constant 0 : i32
    %c0_i32_0 = arith.constant 0 : i32
    %c0_i32_1 = arith.constant 0 : i32
    %c0_i32_2 = arith.constant 0 : i32
    return %arg0, %c0_i32, %c0_i32_0, %c0_i32_1 : i32, i32, i32, i32
  }
  func.func @transform_1(%arg0: i32, %arg1: i32, %arg2: i32) -> (i32, i32) {
    %c0_i32 = arith.constant 0 : i32
    %c0_i32_0 = arith.constant 0 : i32
    return %c0_i32, %arg1 : i32, i32
  }
  func.func @transform_2(%arg0: i32, %arg1: i32, %arg2: i32) -> (i32, i32) {
    %c0_i32 = arith.constant 0 : i32
    %c0_i32_0 = arith.constant 0 : i32
    return %c0_i32, %arg1 : i32, i32
  }
  func.func @transform_3(%arg0: i32, %arg1: i32, %arg2: i32) -> (i32, i32, i32) {
    %c0_i32 = arith.constant 0 : i32
    return %arg0, %arg2, %arg1 : i32, i32, i32
  }
}

</mosaic_0001>

<llo_original>
// kernel: tpu_custom_call.1
$region0: #{tpu_custom_call.1}
  #allocation0 [shape = 'u32[]', space=smem, size = 0x4, offset = 0x4, fixed_abs, tag = 'smem constant byte address 0x4 - core index']
  #allocation1 [shape = 'u32[144,128]{1,0:T(1,128)}', space=vmem, size = 0x12000, scoped, tag = 'internal scratch']
  %s0 = inlined_call_operand.vmem [shape: bf16[2,18,18,4], index: 0, kind: input, shape index: {}]
  %s1 = inlined_call_operand.vmem [shape: bf16[36,128], index: 1, kind: input, shape index: {}]
  %s2 = inlined_call_operand.vmem [shape: f32[1,128], index: 2, kind: input, shape index: {}]
  %s3 = inlined_call_operand.hbm [shape: f32[2,256,128], index: 3, kind: output, shape index: {}]
  %s4 = sld [smem:[#allocation0]]
  $region45: #{tpu_custom_call.1} parent=0
    _
  %s6 = ssub.s32 1, %s4
  %s7 = scalar_select 0, %s6, %s4
  $region1: #{tpu_custom_call.1} parent=0
    #allocation2 [shape = 'u8[262144]{0}', space=vmem, size = 0x40000, scoped, tag = 'output window, operand 0']
    #allocation3 [shape = 's32[2]{0}', space=sflag, size = 0x8, scoped, tag = 'scoped memory for tpu_custom_call.1']
    %8 = vsyncpa [#allocation3], 0
    %s9 = scalar_lea.sflag [#allocation3], 1
    %10 = vsyncpa %s9, 0
    loop: start=0, step=1, limit=4
    $region2: #{tpu_custom_call.1} parent=1 // loop_pre_header
      _
    $region3: #{tpu_custom_call.1} parent=1 // loop_header
      %s12 = sphi 0, %s16
      %p13 = scmp.ge.s32.totalorder %s12, 4
      %s19 = sphi 0, %s38
      %s20 = sphi 0, %s34
      %s21 = sphi 0, %s30
      %s22 = sphi 0, %s19
      %s23 = sphi 0, %s20
      %s24 = sphi 0, %s21
      %s25 = sphi 0, %s22
      %s26 = sphi 0, %s23
      %s27 = sphi 0, %s24
      %s41 = sphi 0, %s43
      %s44 = sphi 0, %s41
      %s45 = sphi 0, %s44
      %s61 = sphi 0, %s45
      %s67 = sphi 0, %s69
      %s70 = sphi 0, %s67
      %s71 = sphi 0, %s70
      %s87 = sphi 0, %s71
      %s93 = sphi 0, %s95
      %s96 = sphi 0, %s93
      %s97 = sphi 0, %s96
      %s113 = sphi 0, %s97
      %s123 = sphi 0, %s125
      %s126 = sphi 0, %s123
      %s127 = sphi 0, %s126
      %s143 = sphi 0, %s127
    $region4: #{tpu_custom_call.1} parent=1 // loop_header_branch
      %15 = sbr.rel (%p13) target = $region8
    $region5: #{tpu_custom_call.1} parent=1 // loop_body
      %s17 = ssub.s32 %s12, 1
      %s18 = ssub.s32 %s12, 2
      %s28 = sadd.s32 1, %s21
      %p29 = scmp.ge.s32.totalorder %s28, 1
      %s30 = scalar_select %p29, 0, %s28
      %s31 = sadd.s32 1, %s20
      %s32 = scalar_select %p29, %s31, %s20
      %p33 = scmp.ge.s32.totalorder %s32, 1
      %s34 = scalar_select %p33, 0, %s32
      %s35 = sadd.s32 1, %s19
      %s36 = scalar_select %p33, %s35, %s19
      %p37 = scmp.ge.s32.totalorder %s36, 2
      %s38 = scalar_select %p37, 0, %s36
      %s39 = ssub.s32 %s19, %s38
      %p40 = scmp.eq.s32.totalorder %s39, 0
      %s42 = sadd.s32 %s41, 1
      %s43 = scalar_select %p40, %s41, %s42
      %p46 = pneg %p40
      %p47 = scmp.eq.s32.totalorder %s12, 1
      %p48 = por %p46, %p47
      %p49 = scmp.ne.s32.totalorder %s41, %s44
      %p50 = scmp.eq.s32.totalorder %s12, 0
      %p51 = por %p49, %p50
      %p52 = scmp.ne.s32.totalorder %s41, %s44
      %p53 = scmp.eq.s32.totalorder %s17, 1
      %p54 = por %p52, %p53
      %p55 = scmp.ne.s32.totalorder %s44, %s45
      %p56 = scmp.eq.s32.totalorder %s17, 0
      %p57 = por %p55, %p56
      %p58 = scmp.ne.s32.totalorder %s44, %s45
      %p59 = scmp.eq.s32.totalorder %s18, 1
      %p60 = por %p58, %p59
      %p62 = scmp.ne.s32.totalorder %s45, %s61
      %p63 = scmp.eq.s32.totalorder %s18, 0
      %p64 = por %p62, %p63
      %s65 = ssub.s32 %s20, %s34
      %p66 = scmp.eq.s32.totalorder %s65, 0
      %s68 = sadd.s32 %s67, 1
      %s69 = scalar_select %p66, %s67, %s68
      %p72 = pneg %p66
      %p73 = scmp.eq.s32.totalorder %s12, 1
      %p74 = por %p72, %p73
      %p75 = scmp.ne.s32.totalorder %s67, %s70
      %p76 = scmp.eq.s32.totalorder %s12, 0
      %p77 = por %p75, %p76
      %p78 = scmp.ne.s32.totalorder %s67, %s70
      %p79 = scmp.eq.s32.totalorder %s17, 1
      %p80 = por %p78, %p79
      %p81 = scmp.ne.s32.totalorder %s70, %s71
      %p82 = scmp.eq.s32.totalorder %s17, 0
      %p83 = por %p81, %p82
      %p84 = scmp.ne.s32.totalorder %s70, %s71
      %p85 = scmp.eq.s32.totalorder %s18, 1
      %p86 = por %p84, %p85
      %p88 = scmp.ne.s32.totalorder %s71, %s87
      %p89 = scmp.eq.s32.totalorder %s18, 0
      %p90 = por %p88, %p89
      %s91 = ssub.s32 %s20, %s34
      %p92 = scmp.eq.s32.totalorder %s91, 0
      %s94 = sadd.s32 %s93, 1
      %s95 = scalar_select %p92, %s93, %s94
      %p98 = pneg %p92
      %p99 = scmp.eq.s32.totalorder %s12, 1
      %p100 = por %p98, %p99
      %p101 = scmp.ne.s32.totalorder %s93, %s96
      %p102 = scmp.eq.s32.totalorder %s12, 0
      %p103 = por %p101, %p102
      %p104 = scmp.ne.s32.totalorder %s93, %s96
      %p105 = scmp.eq.s32.totalorder %s17, 1
      %p106 = por %p104, %p105
      %p107 = scmp.ne.s32.totalorder %s96, %s97
      %p108 = scmp.eq.s32.totalorder %s17, 0
      %p109 = por %p107, %p108
      %p110 = scmp.ne.s32.totalorder %s96, %s97
      %p111 = scmp.eq.s32.totalorder %s18, 1
      %p112 = por %p110, %p111
      %p114 = scmp.ne.s32.totalorder %s97, %s113
      %p115 = scmp.eq.s32.totalorder %s18, 0
      %p116 = por %p114, %p115
      %s117 = ssub.s32 %s19, %s38
      %s118 = ssub.s32 %s21, %s30
      %s119 = sor.u32 %s117, %s118
      %s120 = ssub.s32 %s20, %s34
      %s121 = sor.u32 %s119, %s120
      %p122 = scmp.eq.s32.totalorder %s121, 0
      %s124 = sadd.s32 %s123, 1
      %s125 = scalar_select %p122, %s123, %s124
      %p128 = pneg %p122
      %p129 = scmp.eq.s32.totalorder %s12, 1
      %p130 = por %p128, %p129
      %p131 = scmp.ne.s32.totalorder %s123, %s126
      %p132 = scmp.eq.s32.totalorder %s12, 0
      %p133 = por %p131, %p132
      %p134 = scmp.ne.s32.totalorder %s123, %s126
      %p135 = scmp.eq.s32.totalorder %s17, 1
      %p136 = por %p134, %p135
      %p137 = scmp.ne.s32.totalorder %s126, %s127
      %p138 = scmp.eq.s32.totalorder %s17, 0
      %p139 = por %p137, %p138
      %p140 = scmp.ne.s32.totalorder %s126, %s127
      %p141 = scmp.eq.s32.totalorder %s18, 1
      %p142 = por %p140, %p141
      %p144 = scmp.ne.s32.totalorder %s127, %s143
      %p145 = scmp.eq.s32.totalorder %s18, 0
      %p146 = por %p144, %p145
      %p147 = scmp.le.s32.totalorder 1, %s12
      %p148 = scmp.lt.s32.totalorder %s12, 3
      %p149 = pnand %p147, %p148
      %p150 = pneg %p149
      // Predicated region
      $region9: #{tpu_custom_call.1} parent=5 // pred_check
        _
      $region10: #{tpu_custom_call.1} parent=5 // pred_check_branch
        %152 = sbr.rel (%p149) target = $region12
      $region11: #{tpu_custom_call.1} parent=5 // pred_region
        %s153 = ssub.s32 %s12, 1
        // Predicated region
        $region13: #{tpu_custom_call.1} parent=11 // pred_check
          %p154 = pneg %p83
        $region14: #{tpu_custom_call.1} parent=11 // pred_check_branch
          %156 = sbr.rel (%p154) target = $region16
        $region15: #{tpu_custom_call.1} parent=11 // pred_region
          %p157 = scmp.lt.s32.totalorder %s23, 0
          %s158 = scalar_select %p157, %s23, 0
          %s159 = smul.addr %s158, 4
          %s160 = scalar_lea.vmem %s1, %s159
        $region16: #{tpu_custom_call.1} parent=11 // pred_fallthru
          _
        // Predicated region
        $region17: #{tpu_custom_call.1} parent=11 // pred_check
          %p161 = pneg %p109
        $region18: #{tpu_custom_call.1} parent=11 // pred_check_branch
          %163 = sbr.rel (%p161) target = $region20
        $region19: #{tpu_custom_call.1} parent=11 // pred_region
          %p164 = scmp.lt.s32.totalorder %s23, 0
          %s165 = scalar_select %p164, %s23, 0
          %s166 = scalar_lea.vmem %s2, %s165
        $region20: #{tpu_custom_call.1} parent=11 // pred_fallthru
          _
      $region12: #{tpu_custom_call.1} parent=5 // pred_fallthru
        _
      %p167 = scmp.lt.s32.totalorder %s12, 2
      // Predicated region
      $region21: #{tpu_custom_call.1} parent=5 // pred_check
        %p168 = pneg %p167
      $region22: #{tpu_custom_call.1} parent=5 // pred_check_branch
        %170 = sbr.rel (%p168) target = $region24
      $region23: #{tpu_custom_call.1} parent=5 // pred_region
        // Predicated region
        $region25: #{tpu_custom_call.1} parent=23 // pred_check
          %p171 = pneg %p51
        $region26: #{tpu_custom_call.1} parent=23 // pred_check_branch
          %173 = sbr.rel (%p171) target = $region28
        $region27: #{tpu_custom_call.1} parent=23 // pred_region
          %p174 = scmp.lt.s32.totalorder %s19, 1
          %s175 = scalar_select %p174, %s19, 1
          %s176 = smul.addr %s175, 54
          %s177 = smul.addr %s176, 4
          %s178 = scalar_lea.vmem %s0, %s177
        $region28: #{tpu_custom_call.1} parent=23 // pred_fallthru
          _
      $region24: #{tpu_custom_call.1} parent=5 // pred_fallthru
        _
      %p179 = scmp.le.s32.totalorder 1, %s12
      %p180 = scmp.lt.s32.totalorder %s12, 3
      %p181 = pnand %p179, %p180
      %p182 = pneg %p181
      // Predicated region
      $region29: #{tpu_custom_call.1} parent=5 // pred_check
        _
      $region30: #{tpu_custom_call.1} parent=5 // pred_check_branch
        %184 = sbr.rel (%p181) target = $region32
      $region31: #{tpu_custom_call.1} parent=5 // pred_region
        %s185 = ssub.s32 %s12, 1
        %p186 = scmp.lt.s32.totalorder %s22, 1
        %s187 = scalar_select %p186, %s22, 1
        %s188 = smul.addr %s187, 54
        %s189 = smul.addr %s188, 4
        %s190 = scalar_lea.vmem %s0, %s189
        %p191 = pneg %p57
        %p192 = pneg %p54
        %p193 = scmp.lt.s32.totalorder %s23, 0
        %s194 = scalar_select %p193, %s23, 0
        %s195 = smul.addr %s194, 4
        %s196 = scalar_lea.vmem %s1, %s195
        %p197 = pneg %p83
        %p198 = pneg %p80
        %p199 = scmp.lt.s32.totalorder %s23, 0
        %s200 = scalar_select %p199, %s23, 0
        %s201 = scalar_lea.vmem %s2, %s200
        %p202 = pneg %p109
        %p203 = pneg %p106
        %p204 = pneg %p139
        %p205 = pneg %p136
        %s206 = sand.u32 %s126, 1
        %s207 = scalar_lea.sflag [#allocation3], %s206
        %s208 = sand.u32 %s126, 1
        %s209 = smul.addr %s208, 256
        %s210 = scalar_lea.vmem [#allocation2], %s209
        %p211 = scmp.lt.s32.totalorder %s22, 1
        %s212 = scalar_select %p211, %s22, 1
        %s213 = smul.addr %s212, 54
        %s214 = smul.addr %s213, 4
        %s215 = scalar_lea.vmem %s0, %s214
        %p216 = scmp.lt.s32.totalorder %s23, 0
        %s217 = scalar_select %p216, %s23, 0
        %s218 = smul.addr %s217, 4
        %s219 = scalar_lea.vmem %s1, %s218
        %p220 = scmp.lt.s32.totalorder %s23, 0
        %s221 = scalar_select %p220, %s23, 0
        %s222 = scalar_lea.vmem %s2, %s221
        %s223 = smul.u32 32, %s24
        %s225 = smul.u32 %s24, 16
        %s226 = smul.u32 %s225, 3
        %s227 = smul.addr %s226, 4
        %s228 = scalar_lea.vmem %s215, %s227
        %v229 = vld [vmem:[%s228] sm:$0xf]
        %v230 = vld [vmem:[%s228 + $0x4] sm:$0xf]
        %v231 = vld [vmem:[%s228 + $0x8] sm:$0x1]
        %v232 = vld [vmem:[%s228 + $0xc] sm:$0xf]
        %v233 = vld [vmem:[%s228 + $0x10] sm:$0xf]
        %v234 = vld [vmem:[%s228 + $0x14] sm:$0x1]
        %v235 = vld [vmem:[%s228 + $0x18] sm:$0xf]
        %v236 = vld [vmem:[%s228 + $0x1c] sm:$0xf]
        %v237 = vld [vmem:[%s228 + $0x20] sm:$0x1]
        %v238 = vld [vmem:[%s228 + $0x24] sm:$0xf]
        %v239 = vld [vmem:[%s228 + $0x28] sm:$0xf]
        %v240 = vld [vmem:[%s228 + $0x2c] sm:$0x1]
        %v241 = vld [vmem:[%s228 + $0x30] sm:$0xf]
        %v242 = vld [vmem:[%s228 + $0x34] sm:$0xf]
        %v243 = vld [vmem:[%s228 + $0x38] sm:$0x1]
        %v244 = vld [vmem:[%s228 + $0x3c] sm:$0xf]
        %v245 = vld [vmem:[%s228 + $0x40] sm:$0xf]
        %v246 = vld [vmem:[%s228 + $0x44] sm:$0x1]
        %v247 = vld [vmem:[%s228 + $0x48] sm:$0xf]
        %v248 = vld [vmem:[%s228 + $0x4c] sm:$0xf]
        %v249 = vld [vmem:[%s228 + $0x50] sm:$0x1]
        %v250 = vld [vmem:[%s228 + $0x54] sm:$0xf]
        %v251 = vld [vmem:[%s228 + $0x58] sm:$0xf]
        %v252 = vld [vmem:[%s228 + $0x5c] sm:$0x1]
        %v253 = vld [vmem:[%s228 + $0x60] sm:$0xf]
        %v254 = vld [vmem:[%s228 + $0x64] sm:$0xf]
        %v255 = vld [vmem:[%s228 + $0x68] sm:$0x1]
        %v256 = vld [vmem:[%s228 + $0x6c] sm:$0xf]
        %v257 = vld [vmem:[%s228 + $0x70] sm:$0xf]
        %v258 = vld [vmem:[%s228 + $0x74] sm:$0x1]
        %v259 = vld [vmem:[%s228 + $0x78] sm:$0xf]
        %v260 = vld [vmem:[%s228 + $0x7c] sm:$0xf]
        %v261 = vld [vmem:[%s228 + $0x80] sm:$0x1]
        %v262 = vld [vmem:[%s228 + $0x84] sm:$0xf]
        %v263 = vld [vmem:[%s228 + $0x88] sm:$0xf]
        %v264 = vld [vmem:[%s228 + $0x8c] sm:$0x1]
        %v265 = vld [vmem:[%s228 + $0x90] sm:$0xf]
        %v266 = vld [vmem:[%s228 + $0x94] sm:$0xf]
        %v267 = vld [vmem:[%s228 + $0x98] sm:$0x1]
        %v268 = vld [vmem:[%s228 + $0x9c] sm:$0xf]
        %v269 = vld [vmem:[%s228 + $0xa0] sm:$0xf]
        %v270 = vld [vmem:[%s228 + $0xa4] sm:$0x1]
        %v271 = vld [vmem:[%s228 + $0xa8] sm:$0xf]
        %v272 = vld [vmem:[%s228 + $0xac] sm:$0xf]
        %v273 = vld [vmem:[%s228 + $0xb0] sm:$0x1]
        %v274 = vld [vmem:[%s228 + $0xb4] sm:$0xf]
        %v275 = vld [vmem:[%s228 + $0xb8] sm:$0xf]
        %v276 = vld [vmem:[%s228 + $0xbc] sm:$0x1]
        %v277 = vld [vmem:[%s228 + $0xc0] sm:$0xf]
        %v278 = vld [vmem:[%s228 + $0xc4] sm:$0xf]
        %v279 = vld [vmem:[%s228 + $0xc8] sm:$0x1]
        %v280 = vld [vmem:[%s228 + $0xcc] sm:$0xf]
        %v281 = vld [vmem:[%s228 + $0xd0] sm:$0xf]
        %v282 = vld [vmem:[%s228 + $0xd4] sm:$0x1]
        %vm283 = vsmask.f32 3328
        %vm284 = vsmask.f32 7440
        %vm285 = vmor %vm283, %vm284
        %v287 = vshrl.u32 %v229, 16
        %v289 = vrot.slane %v287, 4
        %v290 = vshll.u32 %v229, 16
        %v292 = vrot.slane %v290, 5
        %v293 = vor.u32 %v289, %v292
        %v294 = vrot.slane %v293, 4
        %v296 = vshll.u32 %v230, 16
        %v298 = vrot.slane %v296, 5
        %v299 = vsel %vm285, %v294, %v298
        %v300 = vshrl.u32 %v230, 16
        %v302 = vrot.slane %v300, 4
        %v303 = vor.u32 %v302, %v298
        %v304 = vrot.slane %v303, 4
        %v306 = vshll.u32 %v231, 16
        %v308 = vrot.slane %v306, 5
        %v309 = vsel %vm285, %v304, %v308
        %v311 = vshrl.u32 %v232, 16
        %v313 = vrot.slane %v311, 4
        %v314 = vshll.u32 %v232, 16
        %v316 = vrot.slane %v314, 5
        %v317 = vor.u32 %v313, %v316
        %v318 = vrot.slane %v317, 4
        %v320 = vshll.u32 %v233, 16
        %v322 = vrot.slane %v320, 5
        %v323 = vsel %vm285, %v318, %v322
        %v324 = vshrl.u32 %v233, 16
        %v326 = vrot.slane %v324, 4
        %v327 = vor.u32 %v326, %v322
        %v328 = vrot.slane %v327, 4
        %v330 = vshll.u32 %v234, 16
        %v332 = vrot.slane %v330, 5
        %v333 = vsel %vm285, %v328, %v332
        %v335 = vshrl.u32 %v235, 16
        %v337 = vrot.slane %v335, 4
        %v338 = vshll.u32 %v235, 16
        %v340 = vrot.slane %v338, 5
        %v341 = vor.u32 %v337, %v340
        %v342 = vrot.slane %v341, 4
        %v344 = vshll.u32 %v236, 16
        %v346 = vrot.slane %v344, 5
        %v347 = vsel %vm285, %v342, %v346
        %v348 = vshrl.u32 %v236, 16
        %v350 = vrot.slane %v348, 4
        %v351 = vor.u32 %v350, %v346
        %v352 = vrot.slane %v351, 4
        %v354 = vshll.u32 %v237, 16
        %v356 = vrot.slane %v354, 5
        %v357 = vsel %vm285, %v352, %v356
        %v359 = vshrl.u32 %v238, 16
        %v361 = vrot.slane %v359, 4
        %v362 = vshll.u32 %v238, 16
        %v364 = vrot.slane %v362, 5
        %v365 = vor.u32 %v361, %v364
        %v366 = vrot.slane %v365, 4
        %v368 = vshll.u32 %v239, 16
        %v370 = vrot.slane %v368, 5
        %v371 = vsel %vm285, %v366, %v370
        %v372 = vshrl.u32 %v239, 16
        %v374 = vrot.slane %v372, 4
        %v375 = vor.u32 %v374, %v370
        %v376 = vrot.slane %v375, 4
        %v378 = vshll.u32 %v240, 16
        %v380 = vrot.slane %v378, 5
        %v381 = vsel %vm285, %v376, %v380
        %v383 = vshrl.u32 %v241, 16
        %v385 = vrot.slane %v383, 4
        %v386 = vshll.u32 %v241, 16
        %v388 = vrot.slane %v386, 5
        %v389 = vor.u32 %v385, %v388
        %v390 = vrot.slane %v389, 4
        %v392 = vshll.u32 %v242, 16
        %v394 = vrot.slane %v392, 5
        %v395 = vsel %vm285, %v390, %v394
        %v396 = vshrl.u32 %v242, 16
        %v398 = vrot.slane %v396, 4
        %v399 = vor.u32 %v398, %v394
        %v400 = vrot.slane %v399, 4
        %v402 = vshll.u32 %v243, 16
        %v404 = vrot.slane %v402, 5
        %v405 = vsel %vm285, %v400, %v404
        %v407 = vshrl.u32 %v244, 16
        %v409 = vrot.slane %v407, 4
        %v410 = vshll.u32 %v244, 16
        %v412 = vrot.slane %v410, 5
        %v413 = vor.u32 %v409, %v412
        %v414 = vrot.slane %v413, 4
        %v416 = vshll.u32 %v245, 16
        %v418 = vrot.slane %v416, 5
        %v419 = vsel %vm285, %v414, %v418
        %v420 = vshrl.u32 %v245, 16
        %v422 = vrot.slane %v420, 4
        %v423 = vor.u32 %v422, %v418
        %v424 = vrot.slane %v423, 4
        %v426 = vshll.u32 %v246, 16
        %v428 = vrot.slane %v426, 5
        %v429 = vsel %vm285, %v424, %v428
        %v431 = vshrl.u32 %v247, 16
        %v433 = vrot.slane %v431, 4
        %v434 = vshll.u32 %v247, 16
        %v436 = vrot.slane %v434, 5
        %v437 = vor.u32 %v433, %v436
        %v438 = vrot.slane %v437, 4
        %v440 = vshll.u32 %v248, 16
        %v442 = vrot.slane %v440, 5
        %v443 = vsel %vm285, %v438, %v442
        %v444 = vshrl.u32 %v248, 16
        %v446 = vrot.slane %v444, 4
        %v447 = vor.u32 %v446, %v442
        %v448 = vrot.slane %v447, 4
        %v450 = vshll.u32 %v249, 16
        %v452 = vrot.slane %v450, 5
        %v453 = vsel %vm285, %v448, %v452
        %v455 = vshrl.u32 %v250, 16
        %v457 = vrot.slane %v455, 4
        %v458 = vshll.u32 %v250, 16
        %v460 = vrot.slane %v458, 5
        %v461 = vor.u32 %v457, %v460
        %v462 = vrot.slane %v461, 4
        %v464 = vshll.u32 %v251, 16
        %v466 = vrot.slane %v464, 5
        %v467 = vsel %vm285, %v462, %v466
        %v468 = vshrl.u32 %v251, 16
        %v470 = vrot.slane %v468, 4
        %v471 = vor.u32 %v470, %v466
        %v472 = vrot.slane %v471, 4
        %v474 = vshll.u32 %v252, 16
        %v476 = vrot.slane %v474, 5
        %v477 = vsel %vm285, %v472, %v476
        %v479 = vshrl.u32 %v253, 16
        %v481 = vrot.slane %v479, 4
        %v482 = vshll.u32 %v253, 16
        %v484 = vrot.slane %v482, 5
        %v485 = vor.u32 %v481, %v484
        %v486 = vrot.slane %v485, 4
        %v488 = vshll.u32 %v254, 16
        %v490 = vrot.slane %v488, 5
        %v491 = vsel %vm285, %v486, %v490
        %v492 = vshrl.u32 %v254, 16
        %v494 = vrot.slane %v492, 4
        %v495 = vor.u32 %v494, %v490
        %v496 = vrot.slane %v495, 4
        %v498 = vshll.u32 %v255, 16
        %v500 = vrot.slane %v498, 5
        %v501 = vsel %vm285, %v496, %v500
        %v503 = vshrl.u32 %v256, 16
        %v505 = vrot.slane %v503, 4
        %v506 = vshll.u32 %v256, 16
        %v508 = vrot.slane %v506, 5
        %v509 = vor.u32 %v505, %v508
        %v510 = vrot.slane %v509, 4
        %v512 = vshll.u32 %v257, 16
        %v514 = vrot.slane %v512, 5
        %v515 = vsel %vm285, %v510, %v514
        %v516 = vshrl.u32 %v257, 16
        %v518 = vrot.slane %v516, 4
        %v519 = vor.u32 %v518, %v514
        %v520 = vrot.slane %v519, 4
        %v522 = vshll.u32 %v258, 16
        %v524 = vrot.slane %v522, 5
        %v525 = vsel %vm285, %v520, %v524
        %v527 = vshrl.u32 %v259, 16
        %v529 = vrot.slane %v527, 4
        %v530 = vshll.u32 %v259, 16
        %v532 = vrot.slane %v530, 5
        %v533 = vor.u32 %v529, %v532
        %v534 = vrot.slane %v533, 4
        %v536 = vshll.u32 %v260, 16
        %v538 = vrot.slane %v536, 5
        %v539 = vsel %vm285, %v534, %v538
        %v540 = vshrl.u32 %v260, 16
        %v542 = vrot.slane %v540, 4
        %v543 = vor.u32 %v542, %v538
        %v544 = vrot.slane %v543, 4
        %v546 = vshll.u32 %v261, 16
        %v548 = vrot.slane %v546, 5
        %v549 = vsel %vm285, %v544, %v548
        %v551 = vshrl.u32 %v262, 16
        %v553 = vrot.slane %v551, 4
        %v554 = vshll.u32 %v262, 16
        %v556 = vrot.slane %v554, 5
        %v557 = vor.u32 %v553, %v556
        %v558 = vrot.slane %v557, 4
        %v560 = vshll.u32 %v263, 16
        %v562 = vrot.slane %v560, 5
        %v563 = vsel %vm285, %v558, %v562
        %v564 = vshrl.u32 %v263, 16
        %v566 = vrot.slane %v564, 4
        %v567 = vor.u32 %v566, %v562
        %v568 = vrot.slane %v567, 4
        %v570 = vshll.u32 %v264, 16
        %v572 = vrot.slane %v570, 5
        %v573 = vsel %vm285, %v568, %v572
        %v575 = vshrl.u32 %v265, 16
        %v577 = vrot.slane %v575, 4
        %v578 = vshll.u32 %v265, 16
        %v580 = vrot.slane %v578, 5
        %v581 = vor.u32 %v577, %v580
        %v582 = vrot.slane %v581, 4
        %v584 = vshll.u32 %v266, 16
        %v586 = vrot.slane %v584, 5
        %v587 = vsel %vm285, %v582, %v586
        %v588 = vshrl.u32 %v266, 16
        %v590 = vrot.slane %v588, 4
        %v591 = vor.u32 %v590, %v586
        %v592 = vrot.slane %v591, 4
        %v594 = vshll.u32 %v267, 16
        %v596 = vrot.slane %v594, 5
        %v597 = vsel %vm285, %v592, %v596
        %v599 = vshrl.u32 %v268, 16
        %v601 = vrot.slane %v599, 4
        %v602 = vshll.u32 %v268, 16
        %v604 = vrot.slane %v602, 5
        %v605 = vor.u32 %v601, %v604
        %v606 = vrot.slane %v605, 4
        %v608 = vshll.u32 %v269, 16
        %v610 = vrot.slane %v608, 5
        %v611 = vsel %vm285, %v606, %v610
        %v612 = vshrl.u32 %v269, 16
        %v614 = vrot.slane %v612, 4
        %v615 = vor.u32 %v614, %v610
        %v616 = vrot.slane %v615, 4
        %v618 = vshll.u32 %v270, 16
        %v620 = vrot.slane %v618, 5
        %v621 = vsel %vm285, %v616, %v620
        %v623 = vshrl.u32 %v271, 16
        %v625 = vrot.slane %v623, 4
        %v626 = vshll.u32 %v271, 16
        %v628 = vrot.slane %v626, 5
        %v629 = vor.u32 %v625, %v628
        %v630 = vrot.slane %v629, 4
        %v632 = vshll.u32 %v272, 16
        %v634 = vrot.slane %v632, 5
        %v635 = vsel %vm285, %v630, %v634
        %v636 = vshrl.u32 %v272, 16
        %v638 = vrot.slane %v636, 4
        %v639 = vor.u32 %v638, %v634
        %v640 = vrot.slane %v639, 4
        %v642 = vshll.u32 %v273, 16
        %v644 = vrot.slane %v642, 5
        %v645 = vsel %vm285, %v640, %v644
        %v647 = vshrl.u32 %v274, 16
        %v649 = vrot.slane %v647, 4
        %v650 = vshll.u32 %v274, 16
        %v652 = vrot.slane %v650, 5
        %v653 = vor.u32 %v649, %v652
        %v654 = vrot.slane %v653, 4
        %v656 = vshll.u32 %v275, 16
        %v658 = vrot.slane %v656, 5
        %v659 = vsel %vm285, %v654, %v658
        %v660 = vshrl.u32 %v275, 16
        %v662 = vrot.slane %v660, 4
        %v663 = vor.u32 %v662, %v658
        %v664 = vrot.slane %v663, 4
        %v666 = vshll.u32 %v276, 16
        %v668 = vrot.slane %v666, 5
        %v669 = vsel %vm285, %v664, %v668
        %vm718 = vcmask 1042432
        %vm719 = vcmask 1046532
        %vm720 = vmor %vm718, %vm719
        %v721 = vrot.slane %v229, 5
        %v722 = vrot.slane %v721, 4
        %v723 = vrot.slane %v230, 5
        %v724 = vsel %vm720, %v722, %v723
        %v725 = vrot.slane %v723, 4
        %v726 = vrot.slane %v231, 5
        %v727 = vsel %vm720, %v725, %v726
        %v728 = vrot.slane %v232, 5
        %v729 = vrot.slane %v728, 4
        %v730 = vrot.slane %v233, 5
        %v731 = vsel %vm720, %v729, %v730
        %v732 = vrot.slane %v730, 4
        %v733 = vrot.slane %v234, 5
        %v734 = vsel %vm720, %v732, %v733
        %v735 = vrot.slane %v235, 5
        %v736 = vrot.slane %v735, 4
        %v737 = vrot.slane %v236, 5
        %v738 = vsel %vm720, %v736, %v737
        %v739 = vrot.slane %v737, 4
        %v740 = vrot.slane %v237, 5
        %v741 = vsel %vm720, %v739, %v740
        %v742 = vrot.slane %v238, 5
        %v743 = vrot.slane %v742, 4
        %v744 = vrot.slane %v239, 5
        %v745 = vsel %vm720, %v743, %v744
        %v746 = vrot.slane %v744, 4
        %v747 = vrot.slane %v240, 5
        %v748 = vsel %vm720, %v746, %v747
        %v749 = vrot.slane %v241, 5
        %v750 = vrot.slane %v749, 4
        %v751 = vrot.slane %v242, 5
        %v752 = vsel %vm720, %v750, %v751
        %v753 = vrot.slane %v751, 4
        %v754 = vrot.slane %v243, 5
        %v755 = vsel %vm720, %v753, %v754
        %v756 = vrot.slane %v244, 5
        %v757 = vrot.slane %v756, 4
        %v758 = vrot.slane %v245, 5
        %v759 = vsel %vm720, %v757, %v758
        %v760 = vrot.slane %v758, 4
        %v761 = vrot.slane %v246, 5
        %v762 = vsel %vm720, %v760, %v761
        %v763 = vrot.slane %v247, 5
        %v764 = vrot.slane %v763, 4
        %v765 = vrot.slane %v248, 5
        %v766 = vsel %vm720, %v764, %v765
        %v767 = vrot.slane %v765, 4
        %v768 = vrot.slane %v249, 5
        %v769 = vsel %vm720, %v767, %v768
        %v770 = vrot.slane %v250, 5
        %v771 = vrot.slane %v770, 4
        %v772 = vrot.slane %v251, 5
        %v773 = vsel %vm720, %v771, %v772
        %v774 = vrot.slane %v772, 4
        %v775 = vrot.slane %v252, 5
        %v776 = vsel %vm720, %v774, %v775
        %v777 = vrot.slane %v253, 5
        %v778 = vrot.slane %v777, 4
        %v779 = vrot.slane %v254, 5
        %v780 = vsel %vm720, %v778, %v779
        %v781 = vrot.slane %v779, 4
        %v782 = vrot.slane %v255, 5
        %v783 = vsel %vm720, %v781, %v782
        %v784 = vrot.slane %v256, 5
        %v785 = vrot.slane %v784, 4
        %v786 = vrot.slane %v257, 5
        %v787 = vsel %vm720, %v785, %v786
        %v788 = vrot.slane %v786, 4
        %v789 = vrot.slane %v258, 5
        %v790 = vsel %vm720, %v788, %v789
        %v791 = vrot.slane %v259, 5
        %v792 = vrot.slane %v791, 4
        %v793 = vrot.slane %v260, 5
        %v794 = vsel %vm720, %v792, %v793
        %v795 = vrot.slane %v793, 4
        %v796 = vrot.slane %v261, 5
        %v797 = vsel %vm720, %v795, %v796
        %v798 = vrot.slane %v262, 5
        %v799 = vrot.slane %v798, 4
        %v800 = vrot.slane %v263, 5
        %v801 = vsel %vm720, %v799, %v800
        %v802 = vrot.slane %v800, 4
        %v803 = vrot.slane %v264, 5
        %v804 = vsel %vm720, %v802, %v803
        %v805 = vrot.slane %v265, 5
        %v806 = vrot.slane %v805, 4
        %v807 = vrot.slane %v266, 5
        %v808 = vsel %vm720, %v806, %v807
        %v809 = vrot.slane %v807, 4
        %v810 = vrot.slane %v267, 5
        %v811 = vsel %vm720, %v809, %v810
        %v812 = vrot.slane %v268, 5
        %v813 = vrot.slane %v812, 4
        %v814 = vrot.slane %v269, 5
        %v815 = vsel %vm720, %v813, %v814
        %v816 = vrot.slane %v814, 4
        %v817 = vrot.slane %v270, 5
        %v818 = vsel %vm720, %v816, %v817
        %v819 = vrot.slane %v271, 5
        %v820 = vrot.slane %v819, 4
        %v821 = vrot.slane %v272, 5
        %v822 = vsel %vm720, %v820, %v821
        %v823 = vrot.slane %v821, 4
        %v824 = vrot.slane %v273, 5
        %v825 = vsel %vm720, %v823, %v824
        %v826 = vrot.slane %v274, 5
        %v827 = vrot.slane %v826, 4
        %v828 = vrot.slane %v275, 5
        %v829 = vsel %vm720, %v827, %v828
        %v830 = vrot.slane %v828, 4
        %v831 = vrot.slane %v276, 5
        %v832 = vsel %vm720, %v830, %v831
        %v834 = vshrl.u32 %v277, 16
        %v836 = vrot.slane %v834, 4
        %v837 = vshll.u32 %v277, 16
        %v839 = vrot.slane %v837, 5
        %v840 = vor.u32 %v836, %v839
        %v841 = vrot.slane %v840, 4
        %v843 = vshll.u32 %v278, 16
        %v845 = vrot.slane %v843, 5
        %v846 = vsel %vm285, %v841, %v845
        %v847 = vshrl.u32 %v278, 16
        %v849 = vrot.slane %v847, 4
        %v850 = vor.u32 %v849, %v845
        %v851 = vrot.slane %v850, 4
        %v853 = vshll.u32 %v279, 16
        %v855 = vrot.slane %v853, 5
        %v856 = vsel %vm285, %v851, %v855
        %v860 = vrot.slane %v277, 5
        %v861 = vrot.slane %v860, 4
        %v862 = vrot.slane %v278, 5
        %v863 = vsel %vm720, %v861, %v862
        %v864 = vrot.slane %v862, 4
        %v865 = vrot.slane %v279, 5
        %v866 = vsel %vm720, %v864, %v865
        %v868 = vshrl.u32 %v280, 16
        %v870 = vrot.slane %v868, 4
        %v871 = vshll.u32 %v280, 16
        %v873 = vrot.slane %v871, 5
        %v874 = vor.u32 %v870, %v873
        %v875 = vrot.slane %v874, 4
        %v877 = vshll.u32 %v281, 16
        %v879 = vrot.slane %v877, 5
        %v880 = vsel %vm285, %v875, %v879
        %v881 = vshrl.u32 %v281, 16
        %v883 = vrot.slane %v881, 4
        %v884 = vor.u32 %v883, %v879
        %v885 = vrot.slane %v884, 4
        %v887 = vshll.u32 %v282, 16
        %v889 = vrot.slane %v887, 5
        %v890 = vsel %vm285, %v885, %v889
        %v894 = vrot.slane %v280, 5
        %v895 = vrot.slane %v894, 4
        %v896 = vrot.slane %v281, 5
        %v897 = vsel %vm720, %v895, %v896
        %v898 = vrot.slane %v896, 4
        %v899 = vrot.slane %v282, 5
        %v900 = vsel %vm720, %v898, %v899
        %v901 = vunpack.c.l.b16 %v229
        %v902 = vunpack.c.l.b16 %v230
        %v903 = vunpack.c.l.b16 %v232
        %v904 = vunpack.c.l.b16 %v233
        %v905 = vunpack.c.l.b16 %v235
        %v906 = vunpack.c.l.b16 %v236
        %v907 = vunpack.c.l.b16 %v238
        %v908 = vunpack.c.l.b16 %v239
        %v909 = vunpack.c.l.b16 %v241
        %v910 = vunpack.c.l.b16 %v242
        %v911 = vunpack.c.l.b16 %v244
        %v912 = vunpack.c.l.b16 %v245
        %v913 = vunpack.c.l.b16 %v247
        %v914 = vunpack.c.l.b16 %v248
        %v915 = vunpack.c.l.b16 %v250
        %v916 = vunpack.c.l.b16 %v251
        %v917 = vunpack.c.l.b16 %v253
        %v918 = vunpack.c.l.b16 %v254
        %v919 = vunpack.c.l.b16 %v256
        %v920 = vunpack.c.l.b16 %v257
        %v921 = vunpack.c.l.b16 %v259
        %v922 = vunpack.c.l.b16 %v260
        %v923 = vunpack.c.l.b16 %v262
        %v924 = vunpack.c.l.b16 %v263
        %v925 = vunpack.c.l.b16 %v265
        %v926 = vunpack.c.l.b16 %v266
        %v927 = vunpack.c.l.b16 %v268
        %v928 = vunpack.c.l.b16 %v269
        %v929 = vunpack.c.l.b16 %v271
        %v930 = vunpack.c.l.b16 %v272
        %v931 = vunpack.c.l.b16 %v274
        %v932 = vunpack.c.l.b16 %v275
        %v933 = vpack.c.b16 %v902, %v901
        %v934 = vpack.c.b16 %v904, %v903
        %v935 = vpack.c.b16 %v906, %v905
        %v936 = vpack.c.b16 %v908, %v907
        %v937 = vpack.c.b16 %v910, %v909
        %v938 = vpack.c.b16 %v912, %v911
        %v939 = vpack.c.b16 %v914, %v913
        %v940 = vpack.c.b16 %v916, %v915
        %v941 = vpack.c.b16 %v918, %v917
        %v942 = vpack.c.b16 %v920, %v919
        %v943 = vpack.c.b16 %v922, %v921
        %v944 = vpack.c.b16 %v924, %v923
        %v945 = vpack.c.b16 %v926, %v925
        %v946 = vpack.c.b16 %v928, %v927
        %v947 = vpack.c.b16 %v930, %v929
        %v948 = vpack.c.b16 %v932, %v931
        %v949 = vunpack.c.l.b16 %v299
        %v950 = vunpack.c.l.b16 %v309
        %v951 = vunpack.c.l.b16 %v323
        %v952 = vunpack.c.l.b16 %v333
        %v953 = vunpack.c.l.b16 %v347
        %v954 = vunpack.c.l.b16 %v357
        %v955 = vunpack.c.l.b16 %v371
        %v956 = vunpack.c.l.b16 %v381
        %v957 = vunpack.c.l.b16 %v395
        %v958 = vunpack.c.l.b16 %v405
        %v959 = vunpack.c.l.b16 %v419
        %v960 = vunpack.c.l.b16 %v429
        %v961 = vunpack.c.l.b16 %v443
        %v962 = vunpack.c.l.b16 %v453
        %v963 = vunpack.c.l.b16 %v467
        %v964 = vunpack.c.l.b16 %v477
        %v965 = vunpack.c.l.b16 %v491
        %v966 = vunpack.c.l.b16 %v501
        %v967 = vunpack.c.l.b16 %v515
        %v968 = vunpack.c.l.b16 %v525
        %v969 = vunpack.c.l.b16 %v539
        %v970 = vunpack.c.l.b16 %v549
        %v971 = vunpack.c.l.b16 %v563
        %v972 = vunpack.c.l.b16 %v573
        %v973 = vunpack.c.l.b16 %v587
        %v974 = vunpack.c.l.b16 %v597
        %v975 = vunpack.c.l.b16 %v611
        %v976 = vunpack.c.l.b16 %v621
        %v977 = vunpack.c.l.b16 %v635
        %v978 = vunpack.c.l.b16 %v645
        %v979 = vunpack.c.l.b16 %v659
        %v980 = vunpack.c.l.b16 %v669
        %v981 = vpack.c.b16 %v950, %v949
        %v982 = vpack.c.b16 %v952, %v951
        %v983 = vpack.c.b16 %v954, %v953
        %v984 = vpack.c.b16 %v956, %v955
        %v985 = vpack.c.b16 %v958, %v957
        %v986 = vpack.c.b16 %v960, %v959
        %v987 = vpack.c.b16 %v962, %v961
        %v988 = vpack.c.b16 %v964, %v963
        %v989 = vpack.c.b16 %v966, %v965
        %v990 = vpack.c.b16 %v968, %v967
        %v991 = vpack.c.b16 %v970, %v969
        %v992 = vpack.c.b16 %v972, %v971
        %v993 = vpack.c.b16 %v974, %v973
        %v994 = vpack.c.b16 %v976, %v975
        %v995 = vpack.c.b16 %v978, %v977
        %v996 = vpack.c.b16 %v980, %v979
        %997 = vrot.lane.b32.xlu0 %v981, 4
        %v998 = vpop.permute.xlu0 %997
        %999 = vrot.lane.b32.xlu0 %v982, 4
        %v1000 = vpop.permute.xlu0 %999
        %1001 = vrot.lane.b32.xlu0 %v983, 4
        %v1002 = vpop.permute.xlu0 %1001
        %1003 = vrot.lane.b32.xlu0 %v984, 4
        %v1004 = vpop.permute.xlu0 %1003
        %1005 = vrot.lane.b32.xlu0 %v985, 4
        %v1006 = vpop.permute.xlu0 %1005
        %1007 = vrot.lane.b32.xlu0 %v986, 4
        %v1008 = vpop.permute.xlu0 %1007
        %1009 = vrot.lane.b32.xlu0 %v987, 4
        %v1010 = vpop.permute.xlu0 %1009
        %1011 = vrot.lane.b32.xlu0 %v988, 4
        %v1012 = vpop.permute.xlu0 %1011
        %1013 = vrot.lane.b32.xlu0 %v989, 4
        %v1014 = vpop.permute.xlu0 %1013
        %1015 = vrot.lane.b32.xlu0 %v990, 4
        %v1016 = vpop.permute.xlu0 %1015
        %1017 = vrot.lane.b32.xlu0 %v991, 4
        %v1018 = vpop.permute.xlu0 %1017
        %1019 = vrot.lane.b32.xlu0 %v992, 4
        %v1020 = vpop.permute.xlu0 %1019
        %1021 = vrot.lane.b32.xlu0 %v993, 4
        %v1022 = vpop.permute.xlu0 %1021
        %1023 = vrot.lane.b32.xlu0 %v994, 4
        %v1024 = vpop.permute.xlu0 %1023
        %1025 = vrot.lane.b32.xlu0 %v995, 4
        %v1026 = vpop.permute.xlu0 %1025
        %1027 = vrot.lane.b32.xlu0 %v996, 4
        %v1028 = vpop.permute.xlu0 %1027
        %v1029 = vunpack.c.l.b16 %v724
        %v1030 = vunpack.c.l.b16 %v727
        %v1031 = vunpack.c.l.b16 %v731
        %v1032 = vunpack.c.l.b16 %v734
        %v1033 = vunpack.c.l.b16 %v738
        %v1034 = vunpack.c.l.b16 %v741
        %v1035 = vunpack.c.l.b16 %v745
        %v1036 = vunpack.c.l.b16 %v748
        %v1037 = vunpack.c.l.b16 %v752
        %v1038 = vunpack.c.l.b16 %v755
        %v1039 = vunpack.c.l.b16 %v759
        %v1040 = vunpack.c.l.b16 %v762
        %v1041 = vunpack.c.l.b16 %v766
        %v1042 = vunpack.c.l.b16 %v769
        %v1043 = vunpack.c.l.b16 %v773
        %v1044 = vunpack.c.l.b16 %v776
        %v1045 = vunpack.c.l.b16 %v780
        %v1046 = vunpack.c.l.b16 %v783
        %v1047 = vunpack.c.l.b16 %v787
        %v1048 = vunpack.c.l.b16 %v790
        %v1049 = vunpack.c.l.b16 %v794
        %v1050 = vunpack.c.l.b16 %v797
        %v1051 = vunpack.c.l.b16 %v801
        %v1052 = vunpack.c.l.b16 %v804
        %v1053 = vunpack.c.l.b16 %v808
        %v1054 = vunpack.c.l.b16 %v811
        %v1055 = vunpack.c.l.b16 %v815
        %v1056 = vunpack.c.l.b16 %v818
        %v1057 = vunpack.c.l.b16 %v822
        %v1058 = vunpack.c.l.b16 %v825
        %v1059 = vunpack.c.l.b16 %v829
        %v1060 = vunpack.c.l.b16 %v832
        %v1061 = vpack.c.b16 %v1030, %v1029
        %v1062 = vpack.c.b16 %v1032, %v1031
        %v1063 = vpack.c.b16 %v1034, %v1033
        %v1064 = vpack.c.b16 %v1036, %v1035
        %v1065 = vpack.c.b16 %v1038, %v1037
        %v1066 = vpack.c.b16 %v1040, %v1039
        %v1067 = vpack.c.b16 %v1042, %v1041
        %v1068 = vpack.c.b16 %v1044, %v1043
        %v1069 = vpack.c.b16 %v1046, %v1045
        %v1070 = vpack.c.b16 %v1048, %v1047
        %v1071 = vpack.c.b16 %v1050, %v1049
        %v1072 = vpack.c.b16 %v1052, %v1051
        %v1073 = vpack.c.b16 %v1054, %v1053
        %v1074 = vpack.c.b16 %v1056, %v1055
        %v1075 = vpack.c.b16 %v1058, %v1057
        %v1076 = vpack.c.b16 %v1060, %v1059
        %1077 = vrot.lane.b32.xlu0 %v1061, 8
        %v1078 = vpop.permute.xlu0 %1077
        %1079 = vrot.lane.b32.xlu0 %v1062, 8
        %v1080 = vpop.permute.xlu0 %1079
        %1081 = vrot.lane.b32.xlu0 %v1063, 8
        %v1082 = vpop.permute.xlu0 %1081
        %1083 = vrot.lane.b32.xlu0 %v1064, 8
        %v1084 = vpop.permute.xlu0 %1083
        %1085 = vrot.lane.b32.xlu0 %v1065, 8
        %v1086 = vpop.permute.xlu0 %1085
        %1087 = vrot.lane.b32.xlu0 %v1066, 8
        %v1088 = vpop.permute.xlu0 %1087
        %1089 = vrot.lane.b32.xlu0 %v1067, 8
        %v1090 = vpop.permute.xlu0 %1089
        %1091 = vrot.lane.b32.xlu0 %v1068, 8
        %v1092 = vpop.permute.xlu0 %1091
        %1093 = vrot.lane.b32.xlu0 %v1069, 8
        %v1094 = vpop.permute.xlu0 %1093
        %1095 = vrot.lane.b32.xlu0 %v1070, 8
        %v1096 = vpop.permute.xlu0 %1095
        %1097 = vrot.lane.b32.xlu0 %v1071, 8
        %v1098 = vpop.permute.xlu0 %1097
        %1099 = vrot.lane.b32.xlu0 %v1072, 8
        %v1100 = vpop.permute.xlu0 %1099
        %1101 = vrot.lane.b32.xlu0 %v1073, 8
        %v1102 = vpop.permute.xlu0 %1101
        %1103 = vrot.lane.b32.xlu0 %v1074, 8
        %v1104 = vpop.permute.xlu0 %1103
        %1105 = vrot.lane.b32.xlu0 %v1075, 8
        %v1106 = vpop.permute.xlu0 %1105
        %1107 = vrot.lane.b32.xlu0 %v1076, 8
        %v1108 = vpop.permute.xlu0 %1107
        %v1109 = vunpack.c.l.b16 %v277
        %v1110 = vunpack.c.l.b16 %v278
        %v1111 = vpack.c.b16 %v1110, %v1109
        %1112 = vrot.lane.b32.xlu0 %v934, 12
        %v1113 = vpop.permute.xlu0 %1112
        %1114 = vrot.lane.b32.xlu0 %v935, 12
        %v1115 = vpop.permute.xlu0 %1114
        %1116 = vrot.lane.b32.xlu0 %v936, 12
        %v1117 = vpop.permute.xlu0 %1116
        %1118 = vrot.lane.b32.xlu0 %v937, 12
        %v1119 = vpop.permute.xlu0 %1118
        %1120 = vrot.lane.b32.xlu0 %v938, 12
        %v1121 = vpop.permute.xlu0 %1120
        %1122 = vrot.lane.b32.xlu0 %v939, 12
        %v1123 = vpop.permute.xlu0 %1122
        %1124 = vrot.lane.b32.xlu0 %v940, 12
        %v1125 = vpop.permute.xlu0 %1124
        %1126 = vrot.lane.b32.xlu0 %v941, 12
        %v1127 = vpop.permute.xlu0 %1126
        %1128 = vrot.lane.b32.xlu0 %v942, 12
        %v1129 = vpop.permute.xlu0 %1128
        %1130 = vrot.lane.b32.xlu0 %v943, 12
        %v1131 = vpop.permute.xlu0 %1130
        %1132 = vrot.lane.b32.xlu0 %v944, 12
        %v1133 = vpop.permute.xlu0 %1132
        %1134 = vrot.lane.b32.xlu0 %v945, 12
        %v1135 = vpop.permute.xlu0 %1134
        %1136 = vrot.lane.b32.xlu0 %v946, 12
        %v1137 = vpop.permute.xlu0 %1136
        %1138 = vrot.lane.b32.xlu0 %v947, 12
        %v1139 = vpop.permute.xlu0 %1138
        %1140 = vrot.lane.b32.xlu0 %v948, 12
        %v1141 = vpop.permute.xlu0 %1140
        %1142 = vrot.lane.b32.xlu0 %v1111, 12
        %v1143 = vpop.permute.xlu0 %1142
        %v1144 = vunpack.c.l.b16 %v846
        %v1145 = vunpack.c.l.b16 %v856
        %v1146 = vpack.c.b16 %v1145, %v1144
        %1147 = vrot.lane.b32.xlu0 %v982, 16
        %v1148 = vpop.permute.xlu0 %1147
        %1149 = vrot.lane.b32.xlu0 %v983, 16
        %v1150 = vpop.permute.xlu0 %1149
        %1151 = vrot.lane.b32.xlu0 %v984, 16
        %v1152 = vpop.permute.xlu0 %1151
        %1153 = vrot.lane.b32.xlu0 %v985, 16
        %v1154 = vpop.permute.xlu0 %1153
        %1155 = vrot.lane.b32.xlu0 %v986, 16
        %v1156 = vpop.permute.xlu0 %1155
        %1157 = vrot.lane.b32.xlu0 %v987, 16
        %v1158 = vpop.permute.xlu0 %1157
        %1159 = vrot.lane.b32.xlu0 %v988, 16
        %v1160 = vpop.permute.xlu0 %1159
        %1161 = vrot.lane.b32.xlu0 %v989, 16
        %v1162 = vpop.permute.xlu0 %1161
        %1163 = vrot.lane.b32.xlu0 %v990, 16
        %v1164 = vpop.permute.xlu0 %1163
        %1165 = vrot.lane.b32.xlu0 %v991, 16
        %v1166 = vpop.permute.xlu0 %1165
        %1167 = vrot.lane.b32.xlu0 %v992, 16
        %v1168 = vpop.permute.xlu0 %1167
        %1169 = vrot.lane.b32.xlu0 %v993, 16
        %v1170 = vpop.permute.xlu0 %1169
        %1171 = vrot.lane.b32.xlu0 %v994, 16
        %v1172 = vpop.permute.xlu0 %1171
        %1173 = vrot.lane.b32.xlu0 %v995, 16
        %v1174 = vpop.permute.xlu0 %1173
        %1175 = vrot.lane.b32.xlu0 %v996, 16
        %v1176 = vpop.permute.xlu0 %1175
        %1177 = vrot.lane.b32.xlu0 %v1146, 16
        %v1178 = vpop.permute.xlu0 %1177
        %v1179 = vunpack.c.l.b16 %v863
        %v1180 = vunpack.c.l.b16 %v866
        %v1181 = vpack.c.b16 %v1180, %v1179
        %1182 = vrot.lane.b32.xlu0 %v1062, 20
        %v1183 = vpop.permute.xlu0 %1182
        %1184 = vrot.lane.b32.xlu0 %v1063, 20
        %v1185 = vpop.permute.xlu0 %1184
        %1186 = vrot.lane.b32.xlu0 %v1064, 20
        %v1187 = vpop.permute.xlu0 %1186
        %1188 = vrot.lane.b32.xlu0 %v1065, 20
        %v1189 = vpop.permute.xlu0 %1188
        %1190 = vrot.lane.b32.xlu0 %v1066, 20
        %v1191 = vpop.permute.xlu0 %1190
        %1192 = vrot.lane.b32.xlu0 %v1067, 20
        %v1193 = vpop.permute.xlu0 %1192
        %1194 = vrot.lane.b32.xlu0 %v1068, 20
        %v1195 = vpop.permute.xlu0 %1194
        %1196 = vrot.lane.b32.xlu0 %v1069, 20
        %v1197 = vpop.permute.xlu0 %1196
        %1198 = vrot.lane.b32.xlu0 %v1070, 20
        %v1199 = vpop.permute.xlu0 %1198
        %1200 = vrot.lane.b32.xlu0 %v1071, 20
        %v1201 = vpop.permute.xlu0 %1200
        %1202 = vrot.lane.b32.xlu0 %v1072, 20
        %v1203 = vpop.permute.xlu0 %1202
        %1204 = vrot.lane.b32.xlu0 %v1073, 20
        %v1205 = vpop.permute.xlu0 %1204
        %1206 = vrot.lane.b32.xlu0 %v1074, 20
        %v1207 = vpop.permute.xlu0 %1206
        %1208 = vrot.lane.b32.xlu0 %v1075, 20
        %v1209 = vpop.permute.xlu0 %1208
        %1210 = vrot.lane.b32.xlu0 %v1076, 20
        %v1211 = vpop.permute.xlu0 %1210
        %1212 = vrot.lane.b32.xlu0 %v1181, 20
        %v1213 = vpop.permute.xlu0 %1212
        %v1214 = vunpack.c.l.b16 %v280
        %v1215 = vunpack.c.l.b16 %v281
        %v1216 = vpack.c.b16 %v1215, %v1214
        %1217 = vrot.lane.b32.xlu0 %v935, 24
        %v1218 = vpop.permute.xlu0 %1217
        %1219 = vrot.lane.b32.xlu0 %v936, 24
        %v1220 = vpop.permute.xlu0 %1219
        %1221 = vrot.lane.b32.xlu0 %v937, 24
        %v1222 = vpop.permute.xlu0 %1221
        %1223 = vrot.lane.b32.xlu0 %v938, 24
        %v1224 = vpop.permute.xlu0 %1223
        %1225 = vrot.lane.b32.xlu0 %v939, 24
        %v1226 = vpop.permute.xlu0 %1225
        %1227 = vrot.lane.b32.xlu0 %v940, 24
        %v1228 = vpop.permute.xlu0 %1227
        %1229 = vrot.lane.b32.xlu0 %v941, 24
        %v1230 = vpop.permute.xlu0 %1229
        %1231 = vrot.lane.b32.xlu0 %v942, 24
        %v1232 = vpop.permute.xlu0 %1231
        %1233 = vrot.lane.b32.xlu0 %v943, 24
        %v1234 = vpop.permute.xlu0 %1233
        %1235 = vrot.lane.b32.xlu0 %v944, 24
        %v1236 = vpop.permute.xlu0 %1235
        %1237 = vrot.lane.b32.xlu0 %v945, 24
        %v1238 = vpop.permute.xlu0 %1237
        %1239 = vrot.lane.b32.xlu0 %v946, 24
        %v1240 = vpop.permute.xlu0 %1239
        %1241 = vrot.lane.b32.xlu0 %v947, 24
        %v1242 = vpop.permute.xlu0 %1241
        %1243 = vrot.lane.b32.xlu0 %v948, 24
        %v1244 = vpop.permute.xlu0 %1243
        %1245 = vrot.lane.b32.xlu0 %v1111, 24
        %v1246 = vpop.permute.xlu0 %1245
        %1247 = vrot.lane.b32.xlu0 %v1216, 24
        %v1248 = vpop.permute.xlu0 %1247
        %v1249 = vunpack.c.l.b16 %v880
        %v1250 = vunpack.c.l.b16 %v890
        %v1251 = vpack.c.b16 %v1250, %v1249
        %1252 = vrot.lane.b32.xlu0 %v983, 28
        %v1253 = vpop.permute.xlu0 %1252
        %1254 = vrot.lane.b32.xlu0 %v984, 28
        %v1255 = vpop.permute.xlu0 %1254
        %1256 = vrot.lane.b32.xlu0 %v985, 28
        %v1257 = vpop.permute.xlu0 %1256
        %1258 = vrot.lane.b32.xlu0 %v986, 28
        %v1259 = vpop.permute.xlu0 %1258
        %1260 = vrot.lane.b32.xlu0 %v987, 28
        %v1261 = vpop.permute.xlu0 %1260
        %1262 = vrot.lane.b32.xlu0 %v988, 28
        %v1263 = vpop.permute.xlu0 %1262
        %1264 = vrot.lane.b32.xlu0 %v989, 28
        %v1265 = vpop.permute.xlu0 %1264
        %1266 = vrot.lane.b32.xlu0 %v990, 28
        %v1267 = vpop.permute.xlu0 %1266
        %1268 = vrot.lane.b32.xlu0 %v991, 28
        %v1269 = vpop.permute.xlu0 %1268
        %1270 = vrot.lane.b32.xlu0 %v992, 28
        %v1271 = vpop.permute.xlu0 %1270
        %1272 = vrot.lane.b32.xlu0 %v993, 28
        %v1273 = vpop.permute.xlu0 %1272
        %1274 = vrot.lane.b32.xlu0 %v994, 28
        %v1275 = vpop.permute.xlu0 %1274
        %1276 = vrot.lane.b32.xlu0 %v995, 28
        %v1277 = vpop.permute.xlu0 %1276
        %1278 = vrot.lane.b32.xlu0 %v996, 28
        %v1279 = vpop.permute.xlu0 %1278
        %1280 = vrot.lane.b32.xlu0 %v1146, 28
        %v1281 = vpop.permute.xlu0 %1280
        %1282 = vrot.lane.b32.xlu0 %v1251, 28
        %v1283 = vpop.permute.xlu0 %1282
        %v1284 = vunpack.c.l.b16 %v897
        %v1285 = vunpack.c.l.b16 %v900
        %v1286 = vpack.c.b16 %v1285, %v1284
        %1287 = vrot.lane.b32.xlu0 %v1063, 32
        %v1288 = vpop.permute.xlu0 %1287
        %1289 = vrot.lane.b32.xlu0 %v1064, 32
        %v1290 = vpop.permute.xlu0 %1289
        %1291 = vrot.lane.b32.xlu0 %v1065, 32
        %v1292 = vpop.permute.xlu0 %1291
        %1293 = vrot.lane.b32.xlu0 %v1066, 32
        %v1294 = vpop.permute.xlu0 %1293
        %1295 = vrot.lane.b32.xlu0 %v1067, 32
        %v1296 = vpop.permute.xlu0 %1295
        %1297 = vrot.lane.b32.xlu0 %v1068, 32
        %v1298 = vpop.permute.xlu0 %1297
        %1299 = vrot.lane.b32.xlu0 %v1069, 32
        %v1300 = vpop.permute.xlu0 %1299
        %1301 = vrot.lane.b32.xlu0 %v1070, 32
        %v1302 = vpop.permute.xlu0 %1301
        %1303 = vrot.lane.b32.xlu0 %v1071, 32
        %v1304 = vpop.permute.xlu0 %1303
        %1305 = vrot.lane.b32.xlu0 %v1072, 32
        %v1306 = vpop.permute.xlu0 %1305
        %1307 = vrot.lane.b32.xlu0 %v1073, 32
        %v1308 = vpop.permute.xlu0 %1307
        %1309 = vrot.lane.b32.xlu0 %v1074, 32
        %v1310 = vpop.permute.xlu0 %1309
        %1311 = vrot.lane.b32.xlu0 %v1075, 32
        %v1312 = vpop.permute.xlu0 %1311
        %1313 = vrot.lane.b32.xlu0 %v1076, 32
        %v1314 = vpop.permute.xlu0 %1313
        %1315 = vrot.lane.b32.xlu0 %v1181, 32
        %v1316 = vpop.permute.xlu0 %1315
        %1317 = vrot.lane.b32.xlu0 %v1286, 32
        %v1318 = vpop.permute.xlu0 %1317
        %vm1319 = vcmask 31744
        %v1322 = vsel %vm1319, %v933, %v998
        %v1325 = vsel %vm1319, %v934, %v1000
        %v1328 = vsel %vm1319, %v935, %v1002
        %v1331 = vsel %vm1319, %v936, %v1004
        %v1334 = vsel %vm1319, %v937, %v1006
        %v1337 = vsel %vm1319, %v938, %v1008
        %v1340 = vsel %vm1319, %v939, %v1010
        %v1343 = vsel %vm1319, %v940, %v1012
        %v1346 = vsel %vm1319, %v941, %v1014
        %v1349 = vsel %vm1319, %v942, %v1016
        %v1352 = vsel %vm1319, %v943, %v1018
        %v1355 = vsel %vm1319, %v944, %v1020
        %v1358 = vsel %vm1319, %v945, %v1022
        %v1361 = vsel %vm1319, %v946, %v1024
        %v1364 = vsel %vm1319, %v947, %v1026
        %v1367 = vsel %vm1319, %v948, %v1028
        %vm1368 = vcmask 64512
        %v1370 = vsel %vm1368, %v1322, %v1078
        %v1372 = vsel %vm1368, %v1325, %v1080
        %v1374 = vsel %vm1368, %v1328, %v1082
        %v1376 = vsel %vm1368, %v1331, %v1084
        %v1378 = vsel %vm1368, %v1334, %v1086
        %v1380 = vsel %vm1368, %v1337, %v1088
        %v1382 = vsel %vm1368, %v1340, %v1090
        %v1384 = vsel %vm1368, %v1343, %v1092
        %v1386 = vsel %vm1368, %v1346, %v1094
        %v1388 = vsel %vm1368, %v1349, %v1096
        %v1390 = vsel %vm1368, %v1352, %v1098
        %v1392 = vsel %vm1368, %v1355, %v1100
        %v1394 = vsel %vm1368, %v1358, %v1102
        %v1396 = vsel %vm1368, %v1361, %v1104
        %v1398 = vsel %vm1368, %v1364, %v1106
        %v1400 = vsel %vm1368, %v1367, %v1108
        %vm1401 = vcmask 97280
        %v1403 = vsel %vm1401, %v1370, %v1113
        %v1405 = vsel %vm1401, %v1372, %v1115
        %v1407 = vsel %vm1401, %v1374, %v1117
        %v1409 = vsel %vm1401, %v1376, %v1119
        %v1411 = vsel %vm1401, %v1378, %v1121
        %v1413 = vsel %vm1401, %v1380, %v1123
        %v1415 = vsel %vm1401, %v1382, %v1125
        %v1417 = vsel %vm1401, %v1384, %v1127
        %v1419 = vsel %vm1401, %v1386, %v1129
        %v1421 = vsel %vm1401, %v1388, %v1131
        %v1423 = vsel %vm1401, %v1390, %v1133
        %v1425 = vsel %vm1401, %v1392, %v1135
        %v1427 = vsel %vm1401, %v1394, %v1137
        %v1429 = vsel %vm1401, %v1396, %v1139
        %v1431 = vsel %vm1401, %v1398, %v1141
        %v1433 = vsel %vm1401, %v1400, %v1143
        %vm1434 = vcmask 130048
        %v1436 = vsel %vm1434, %v1403, %v1148
        %v1438 = vsel %vm1434, %v1405, %v1150
        %v1440 = vsel %vm1434, %v1407, %v1152
        %v1442 = vsel %vm1434, %v1409, %v1154
        %v1444 = vsel %vm1434, %v1411, %v1156
        %v1446 = vsel %vm1434, %v1413, %v1158
        %v1448 = vsel %vm1434, %v1415, %v1160
        %v1450 = vsel %vm1434, %v1417, %v1162
        %v1452 = vsel %vm1434, %v1419, %v1164
        %v1454 = vsel %vm1434, %v1421, %v1166
        %v1456 = vsel %vm1434, %v1423, %v1168
        %v1458 = vsel %vm1434, %v1425, %v1170
        %v1460 = vsel %vm1434, %v1427, %v1172
        %v1462 = vsel %vm1434, %v1429, %v1174
        %v1464 = vsel %vm1434, %v1431, %v1176
        %v1466 = vsel %vm1434, %v1433, %v1178
        %vm1467 = vcmask 162816
        %v1469 = vsel %vm1467, %v1436, %v1183
        %v1471 = vsel %vm1467, %v1438, %v1185
        %v1473 = vsel %vm1467, %v1440, %v1187
        %v1475 = vsel %vm1467, %v1442, %v1189
        %v1477 = vsel %vm1467, %v1444, %v1191
        %v1479 = vsel %vm1467, %v1446, %v1193
        %v1481 = vsel %vm1467, %v1448, %v1195
        %v1483 = vsel %vm1467, %v1450, %v1197
        %v1485 = vsel %vm1467, %v1452, %v1199
        %v1487 = vsel %vm1467, %v1454, %v1201
        %v1489 = vsel %vm1467, %v1456, %v1203
        %v1491 = vsel %vm1467, %v1458, %v1205
        %v1493 = vsel %vm1467, %v1460, %v1207
        %v1495 = vsel %vm1467, %v1462, %v1209
        %v1497 = vsel %vm1467, %v1464, %v1211
        %v1499 = vsel %vm1467, %v1466, %v1213
        %vm1500 = vcmask 195584
        %v1502 = vsel %vm1500, %v1469, %v1218
        %v1504 = vsel %vm1500, %v1471, %v1220
        %v1506 = vsel %vm1500, %v1473, %v1222
        %v1508 = vsel %vm1500, %v1475, %v1224
        %v1510 = vsel %vm1500, %v1477, %v1226
        %v1512 = vsel %vm1500, %v1479, %v1228
        %v1514 = vsel %vm1500, %v1481, %v1230
        %v1516 = vsel %vm1500, %v1483, %v1232
        %v1518 = vsel %vm1500, %v1485, %v1234
        %v1520 = vsel %vm1500, %v1487, %v1236
        %v1522 = vsel %vm1500, %v1489, %v1238
        %v1524 = vsel %vm1500, %v1491, %v1240
        %v1526 = vsel %vm1500, %v1493, %v1242
        %v1528 = vsel %vm1500, %v1495, %v1244
        %v1530 = vsel %vm1500, %v1497, %v1246
        %v1532 = vsel %vm1500, %v1499, %v1248
        %vm1533 = vcmask 228352
        %v1535 = vsel %vm1533, %v1502, %v1253
        %v1537 = vsel %vm1533, %v1504, %v1255
        %v1539 = vsel %vm1533, %v1506, %v1257
        %v1541 = vsel %vm1533, %v1508, %v1259
        %v1543 = vsel %vm1533, %v1510, %v1261
        %v1545 = vsel %vm1533, %v1512, %v1263
        %v1547 = vsel %vm1533, %v1514, %v1265
        %v1549 = vsel %vm1533, %v1516, %v1267
        %v1551 = vsel %vm1533, %v1518, %v1269
        %v1553 = vsel %vm1533, %v1520, %v1271
        %v1555 = vsel %vm1533, %v1522, %v1273
        %v1557 = vsel %vm1533, %v1524, %v1275
        %v1559 = vsel %vm1533, %v1526, %v1277
        %v1561 = vsel %vm1533, %v1528, %v1279
        %v1563 = vsel %vm1533, %v1530, %v1281
        %v1565 = vsel %vm1533, %v1532, %v1283
        %vm1566 = vcmask 261120
        %v1568 = vsel %vm1566, %v1535, %v1288
        %v1570 = vsel %vm1566, %v1537, %v1290
        %v1572 = vsel %vm1566, %v1539, %v1292
        %v1574 = vsel %vm1566, %v1541, %v1294
        %v1576 = vsel %vm1566, %v1543, %v1296
        %v1578 = vsel %vm1566, %v1545, %v1298
        %v1580 = vsel %vm1566, %v1547, %v1300
        %v1582 = vsel %vm1566, %v1549, %v1302
        %v1584 = vsel %vm1566, %v1551, %v1304
        %v1586 = vsel %vm1566, %v1553, %v1306
        %v1588 = vsel %vm1566, %v1555, %v1308
        %v1590 = vsel %vm1566, %v1557, %v1310
        %v1592 = vsel %vm1566, %v1559, %v1312
        %v1594 = vsel %vm1566, %v1561, %v1314
        %v1596 = vsel %vm1566, %v1563, %v1316
        %v1598 = vsel %vm1566, %v1565, %v1318
        %v1599 = vld [vmem:[%s219] sm:$0xf]
        %v1600 = vld [vmem:[%s219 + $0x4] sm:$0xf]
        %v1601 = vld [vmem:[%s219 + $0x8] sm:$0xf]
        %v1602 = vld [vmem:[%s219 + $0xc] sm:$0xf]
        %v1603 = vld [vmem:[%s219 + $0x10] sm:$0x3]
        %v1604 = vld [vmem:[%s222] sm:$0x1]
        %v1606 = vlaneseq
        %v1607 = vshrl.u32 %v1606, 7
        %v1608 = vsub.s32 0, %v1607
        %v1609 = vrot.slane %v1604, %v1608
        %v1616 = vunpack.c.l.b16 %v1599
        %v1617 = vunpack.c.l.b16 %v1600
        %v1618 = vunpack.c.l.b16 %v1601
        %v1619 = vunpack.c.l.b16 %v1602
        %v1620 = vunpack.c.l.b16 %v1603
        %v1621 = vpack.c.b16 %v1617, %v1616
        %v1622 = vpack.c.b16 %v1619, %v1618
        %v1623 = vpack.c.b16 %v1620, %v1620
        %vm1626 = vcmask 293888
        %v1627 = vsel %vm1626, %v1568, 0
        %v1629 = vsel %vm1626, %v1570, 0
        %v1631 = vsel %vm1626, %v1572, 0
        %v1633 = vsel %vm1626, %v1574, 0
        %v1635 = vsel %vm1626, %v1576, 0
        %v1637 = vsel %vm1626, %v1578, 0
        %v1639 = vsel %vm1626, %v1580, 0
        %v1641 = vsel %vm1626, %v1582, 0
        %v1643 = vsel %vm1626, %v1584, 0
        %v1645 = vsel %vm1626, %v1586, 0
        %v1647 = vsel %vm1626, %v1588, 0
        %v1649 = vsel %vm1626, %v1590, 0
        %v1651 = vsel %vm1626, %v1592, 0
        %v1653 = vsel %vm1626, %v1594, 0
        %v1655 = vsel %vm1626, %v1596, 0
        %v1657 = vsel %vm1626, %v1598, 0
        %vm1659 = vcmask 1041408
        %v1661 = vsel %vm1659, %v1623, 0
        %1663 = vmatprep.subr.bf16.mxu0 0
        %1664 = vmatpush1.bf16.msra.mxu0 0
        %1665 = vmatprep.subr.bf16.mxu0 0
        %1666 = vmatpush1.bf16.msra.mxu0 0
        %1667 = vmatprep.subr.bf16.mxu0 0
        %1668 = vmatpush1.bf16.msra.mxu0 0
        %1669 = vmatprep.subr.bf16.mxu0 0
        %1670 = vmatpush1.bf16.msra.mxu0 0
        %1671 = vmatprep.subr.bf16.mxu0 0
        %1672 = vmatpush1.bf16.msra.mxu0 0
        %1673 = vmatprep.subr.bf16.mxu0 0
        %1674 = vmatpush1.bf16.msra.mxu0 %v1661
        %1675 = vmatprep.subr.bf16.mxu0 0
        %1676 = vmatpush1.bf16.msra.mxu0 %v1622
        %1677 = vmatprep.subr.bf16.mxu0 0
        %1678 = vmatpush1.bf16.msra.mxu0 %v1621
        %1679 = vmatprep.subr.bf16.mxu0 0
        %1680 = vmatpush2.bf16.msra.mxu0 0
        %1681 = vmatprep.subr.bf16.mxu0 0
        %1682 = vmatpush2.bf16.msra.mxu0 0
        %1683 = vmatprep.subr.bf16.mxu0 0
        %1684 = vmatpush2.bf16.msra.mxu0 0
        %1685 = vmatprep.subr.bf16.mxu0 0
        %1686 = vmatpush2.bf16.msra.mxu0 0
        %1687 = vmatprep.subr.bf16.mxu0 0
        %1688 = vmatpush2.bf16.msra.mxu0 0
        %1689 = vmatprep.subr.bf16.mxu0 0
        %1690 = vmatpush2.bf16.msra.mxu0 0
        %1691 = vmatprep.subr.bf16.mxu0 0
        %1692 = vmatpush2.bf16.msra.mxu0 0
        %1693 = vmatprep.subr.bf16.mxu0 0
        %1694 = vmatpush2.bf16.msra.mxu0 0
        %1695 = vmatprep.mubr.bf16.mxu0 0
        %1696 = vmatmul.mubr.bf16.gmra.mxu0 %v1627
        %v1697 = vpop.f32.mrf.mxu0
        %v1698 = vadd.f32 %v1609, %v1697
        %v1699 = vpop.f32.mrf.mxu0
        %v1700 = vpop.f32.mrf.mxu0
        %v1701 = vadd.f32 %v1609, %v1700
        %v1702 = vpop.f32.mrf.mxu0
        %1703 = vmatprep.mubr.bf16.mxu0 0
        %1704 = vmatmul.mubr.bf16.gmra.mxu0 %v1629
        %v1705 = vpop.f32.mrf.mxu0
        %v1706 = vadd.f32 %v1609, %v1705
        %v1707 = vpop.f32.mrf.mxu0
        %v1708 = vpop.f32.mrf.mxu0
        %v1709 = vadd.f32 %v1609, %v1708
        %v1710 = vpop.f32.mrf.mxu0
        %1711 = vmatprep.mubr.bf16.mxu0 0
        %1712 = vmatmul.mubr.bf16.gmra.mxu0 %v1631
        %v1713 = vpop.f32.mrf.mxu0
        %v1714 = vadd.f32 %v1609, %v1713
        %v1715 = vpop.f32.mrf.mxu0
        %v1716 = vpop.f32.mrf.mxu0
        %v1717 = vadd.f32 %v1609, %v1716
        %v1718 = vpop.f32.mrf.mxu0
        %1719 = vmatprep.mubr.bf16.mxu0 0
        %1720 = vmatmul.mubr.bf16.gmra.mxu0 %v1633
        %v1721 = vpop.f32.mrf.mxu0
        %v1722 = vadd.f32 %v1609, %v1721
        %v1723 = vpop.f32.mrf.mxu0
        %v1724 = vpop.f32.mrf.mxu0
        %v1725 = vadd.f32 %v1609, %v1724
        %v1726 = vpop.f32.mrf.mxu0
        %1727 = vmatprep.mubr.bf16.mxu0 0
        %1728 = vmatmul.mubr.bf16.gmra.mxu0 %v1635
        %v1729 = vpop.f32.mrf.mxu0
        %v1730 = vadd.f32 %v1609, %v1729
        %v1731 = vpop.f32.mrf.mxu0
        %v1732 = vpop.f32.mrf.mxu0
        %v1733 = vadd.f32 %v1609, %v1732
        %v1734 = vpop.f32.mrf.mxu0
        %1735 = vmatprep.mubr.bf16.mxu0 0
        %1736 = vmatmul.mubr.bf16.gmra.mxu0 %v1637
        %v1737 = vpop.f32.mrf.mxu0
        %v1738 = vadd.f32 %v1609, %v1737
        %v1739 = vpop.f32.mrf.mxu0
        %v1740 = vpop.f32.mrf.mxu0
        %v1741 = vadd.f32 %v1609, %v1740
        %v1742 = vpop.f32.mrf.mxu0
        %1743 = vmatprep.mubr.bf16.mxu0 0
        %1744 = vmatmul.mubr.bf16.gmra.mxu0 %v1639
        %v1745 = vpop.f32.mrf.mxu0
        %v1746 = vadd.f32 %v1609, %v1745
        %v1747 = vpop.f32.mrf.mxu0
        %v1748 = vpop.f32.mrf.mxu0
        %v1749 = vadd.f32 %v1609, %v1748
        %v1750 = vpop.f32.mrf.mxu0
        %1751 = vmatprep.mubr.bf16.mxu0 0
        %1752 = vmatmul.mubr.bf16.gmra.mxu0 %v1641
        %v1753 = vpop.f32.mrf.mxu0
        %v1754 = vadd.f32 %v1609, %v1753
        %v1755 = vpop.f32.mrf.mxu0
        %v1756 = vpop.f32.mrf.mxu0
        %v1757 = vadd.f32 %v1609, %v1756
        %v1758 = vpop.f32.mrf.mxu0
        %1759 = vmatprep.mubr.bf16.mxu0 0
        %1760 = vmatmul.mubr.bf16.gmra.mxu0 %v1643
        %v1761 = vpop.f32.mrf.mxu0
        %v1762 = vadd.f32 %v1609, %v1761
        %v1763 = vpop.f32.mrf.mxu0
        %v1764 = vpop.f32.mrf.mxu0
        %v1765 = vadd.f32 %v1609, %v1764
        %v1766 = vpop.f32.mrf.mxu0
        %1767 = vmatprep.mubr.bf16.mxu0 0
        %1768 = vmatmul.mubr.bf16.gmra.mxu0 %v1645
        %v1769 = vpop.f32.mrf.mxu0
        %v1770 = vadd.f32 %v1609, %v1769
        %v1771 = vpop.f32.mrf.mxu0
        %v1772 = vpop.f32.mrf.mxu0
        %v1773 = vadd.f32 %v1609, %v1772
        %v1774 = vpop.f32.mrf.mxu0
        %1775 = vmatprep.mubr.bf16.mxu0 0
        %1776 = vmatmul.mubr.bf16.gmra.mxu0 %v1647
        %v1777 = vpop.f32.mrf.mxu0
        %v1778 = vadd.f32 %v1609, %v1777
        %v1779 = vpop.f32.mrf.mxu0
        %v1780 = vpop.f32.mrf.mxu0
        %v1781 = vadd.f32 %v1609, %v1780
        %v1782 = vpop.f32.mrf.mxu0
        %1783 = vmatprep.mubr.bf16.mxu0 0
        %1784 = vmatmul.mubr.bf16.gmra.mxu0 %v1649
        %v1785 = vpop.f32.mrf.mxu0
        %v1786 = vadd.f32 %v1609, %v1785
        %v1787 = vpop.f32.mrf.mxu0
        %v1788 = vpop.f32.mrf.mxu0
        %v1789 = vadd.f32 %v1609, %v1788
        %v1790 = vpop.f32.mrf.mxu0
        %1791 = vmatprep.mubr.bf16.mxu0 0
        %1792 = vmatmul.mubr.bf16.gmra.mxu0 %v1651
        %v1793 = vpop.f32.mrf.mxu0
        %v1794 = vadd.f32 %v1609, %v1793
        %v1795 = vpop.f32.mrf.mxu0
        %v1796 = vpop.f32.mrf.mxu0
        %v1797 = vadd.f32 %v1609, %v1796
        %v1798 = vpop.f32.mrf.mxu0
        %1799 = vmatprep.mubr.bf16.mxu0 0
        %1800 = vmatmul.mubr.bf16.gmra.mxu0 %v1653
        %v1801 = vpop.f32.mrf.mxu0
        %v1802 = vadd.f32 %v1609, %v1801
        %v1803 = vpop.f32.mrf.mxu0
        %v1804 = vpop.f32.mrf.mxu0
        %v1805 = vadd.f32 %v1609, %v1804
        %v1806 = vpop.f32.mrf.mxu0
        %1807 = vmatprep.mubr.bf16.mxu0 0
        %1808 = vmatmul.mubr.bf16.gmra.mxu0 %v1655
        %v1809 = vpop.f32.mrf.mxu0
        %v1810 = vadd.f32 %v1609, %v1809
        %v1811 = vpop.f32.mrf.mxu0
        %v1812 = vpop.f32.mrf.mxu0
        %v1813 = vadd.f32 %v1609, %v1812
        %v1814 = vpop.f32.mrf.mxu0
        %1815 = vmatprep.mubr.bf16.mxu0 0
        %1816 = vmatmul.mubr.bf16.gmra.mxu0 %v1657
        %v1817 = vpop.f32.mrf.mxu0
        %v1818 = vadd.f32 %v1609, %v1817
        %v1819 = vpop.f32.mrf.mxu0
        %v1820 = vpop.f32.mrf.mxu0
        %v1821 = vadd.f32 %v1609, %v1820
        %v1822 = vpop.f32.mrf.mxu0
        %1823 = vdwg.mxu0
        %1824 = vst [vmem:[%s210] sm:$0xff] %v1698
        %1825 = vst [vmem:[%s210 + $0x8] sm:$0xff] %v1701
        %1826 = vst [vmem:[%s210 + $0x10] sm:$0xff] %v1706
        %1827 = vst [vmem:[%s210 + $0x18] sm:$0xff] %v1709
        %1828 = vst [vmem:[%s210 + $0x20] sm:$0xff] %v1714
        %1829 = vst [vmem:[%s210 + $0x28] sm:$0xff] %v1717
        %1830 = vst [vmem:[%s210 + $0x30] sm:$0xff] %v1722
        %1831 = vst [vmem:[%s210 + $0x38] sm:$0xff] %v1725
        %1832 = vst [vmem:[%s210 + $0x40] sm:$0xff] %v1730
        %1833 = vst [vmem:[%s210 + $0x48] sm:$0xff] %v1733
        %1834 = vst [vmem:[%s210 + $0x50] sm:$0xff] %v1738
        %1835 = vst [vmem:[%s210 + $0x58] sm:$0xff] %v1741
        %1836 = vst [vmem:[%s210 + $0x60] sm:$0xff] %v1746
        %1837 = vst [vmem:[%s210 + $0x68] sm:$0xff] %v1749
        %1838 = vst [vmem:[%s210 + $0x70] sm:$0xff] %v1754
        %1839 = vst [vmem:[%s210 + $0x78] sm:$0xff] %v1757
        %1840 = vst [vmem:[%s210 + $0x80] sm:$0xff] %v1762
        %1841 = vst [vmem:[%s210 + $0x88] sm:$0xff] %v1765
        %1842 = vst [vmem:[%s210 + $0x90] sm:$0xff] %v1770
        %1843 = vst [vmem:[%s210 + $0x98] sm:$0xff] %v1773
        %1844 = vst [vmem:[%s210 + $0xa0] sm:$0xff] %v1778
        %1845 = vst [vmem:[%s210 + $0xa8] sm:$0xff] %v1781
        %1846 = vst [vmem:[%s210 + $0xb0] sm:$0xff] %v1786
        %1847 = vst [vmem:[%s210 + $0xb8] sm:$0xff] %v1789
        %1848 = vst [vmem:[%s210 + $0xc0] sm:$0xff] %v1794
        %1849 = vst [vmem:[%s210 + $0xc8] sm:$0xff] %v1797
        %1850 = vst [vmem:[%s210 + $0xd0] sm:$0xff] %v1802
        %1851 = vst [vmem:[%s210 + $0xd8] sm:$0xff] %v1805
        %1852 = vst [vmem:[%s210 + $0xe0] sm:$0xff] %v1810
        %1853 = vst [vmem:[%s210 + $0xe8] sm:$0xff] %v1813
        %1854 = vst [vmem:[%s210 + $0xf0] sm:$0xff] %v1818
        %1855 = vst [vmem:[%s210 + $0xf8] sm:$0xff] %v1821
        %s1856 = sand.u32 %s126, 1
        %s1857 = scalar_lea.sflag [#allocation3], %s1856
        %s1858 = sand.u32 %s126, 1
        %s1859 = smul.addr %s1858, 256
        %s1860 = scalar_lea.vmem [#allocation2], %s1859
        // Predicated region
        $region33: #{tpu_custom_call.1} parent=31 // pred_check
          %p1861 = pneg %p136
        $region34: #{tpu_custom_call.1} parent=31 // pred_check_branch
          %1863 = sbr.rel (%p1861) target = $region36
        $region35: #{tpu_custom_call.1} parent=31 // pred_region
          %s1864 = smul.u32 32, %s24
          %s1866 = ssub.s32 4096, 4096
          %1867 = vsyncadd %s1857, %s1866
          %s1868 = sadd.s32 %s23, %s1864
          %s1869 = smul.addr %s22, 32
          %s1870 = sadd.s32 %s1868, %s1869
          %s1871 = smul.addr %s1870, 128
          %s1872 = scalar_lea.hbm %s3, %s1871
          %s1873 = sshll.u32 %s1860, 4
          %s1874 = int_to_ptr.vmem [resolvable:$true] %s1873
          %1879 = dma.vmem_to_hbm [thread:$0]  %s1874, 4096, %s1872, %s1857, 128, 128, 8
        $region36: #{tpu_custom_call.1} parent=31 // pred_fallthru
          _
      $region32: #{tpu_custom_call.1} parent=5 // pred_fallthru
        _
      %p1880 = scmp.le.s32.totalorder 2, %s12
      // Predicated region
      $region37: #{tpu_custom_call.1} parent=5 // pred_check
        %p1881 = pneg %p1880
      $region38: #{tpu_custom_call.1} parent=5 // pred_check_branch
        %1883 = sbr.rel (%p1881) target = $region40
      $region39: #{tpu_custom_call.1} parent=5 // pred_region
        %s1884 = ssub.s32 %s12, 2
        // Predicated region
        $region41: #{tpu_custom_call.1} parent=39 // pred_check
          %p1885 = pneg %p142
        $region42: #{tpu_custom_call.1} parent=39 // pred_check_branch
          %1887 = sbr.rel (%p1885) target = $region44
        $region43: #{tpu_custom_call.1} parent=39 // pred_region
          %s1888 = sand.u32 %s127, 1
          %s1889 = scalar_lea.sflag [#allocation3], %s1888
          %s1890 = sand.u32 %s127, 1
          %s1891 = smul.addr %s1890, 256
          %s1892 = scalar_lea.vmem [#allocation2], %s1891
          %1893 = dma.done %s1889, 4096
        $region44: #{tpu_custom_call.1} parent=39 // pred_fallthru
          _
      $region40: #{tpu_custom_call.1} parent=5 // pred_fallthru
        _
    $region6: #{tpu_custom_call.1} parent=1 // loop_footer
      %s16 = sadd.s32 1, %s12
    $region7: #{tpu_custom_call.1} parent=1 // loop_footer_branch
      %11 = sbr.rel target = $region3
    $region8: #{tpu_custom_call.1} parent=1 // loop_exit
      _
    %1894 = vsyncpa [#allocation3], 1
    %s1895 = scalar_lea.sflag [#allocation3], 1
    %1896 = vsyncpa %s1895, 1

</llo_original>
